<compile_context>
chip_gen: v5e
topology: v5e:2x2
jax: 0.10.0
libtpu: 0.0.40
codegen_flags: <defaults>
</compile_context>

<pallas_src>
import functools

import jax
import jax.numpy as jnp
from jax.experimental import pallas as pl
from jax.experimental.pallas import tpu as pltpu

D_IN = 784      # 28 * 28 ; blocks use the full-K extent (full-dims escape hatch, 784 % 16 == 0)
NUM_H1 = 1024


def _default_tn():
    """N-tile size. v5e/v6e (single TensorCore): tn=1024 -> grid=(1,), one big weight DMA
    and zero per-grid-step overhead. v7x (2 TCs): tn=512 -> 2 'parallel' steps, one per core."""
    # TODO(synk): on v7x also benchmark grid=(1,) tn=1024 (single core) against the 2x512
    # megacore split and keep whichever wins on real traces.
    try:
        kind = jax.devices()[0].device_kind.lower()
    except Exception:
        return NUM_H1
    if "v7" in kind:
        return 512
    return NUM_H1


def _linear_relu_kernel(x_ref, w_ref, b_ref, o_ref):
    # x_ref: (m, D_IN)  f32  (grid-invariant block -> DMA'd once; cast to bf16 in-kernel)
    # w_ref: (D_IN, tn) bf16 (weight column tile, dominant HBM traffic)
    # b_ref: (1, tn)    f32
    # o_ref: (m, tn)    f32  (lane-dense: tn % 128 == 0)
    x_bf16 = x_ref[...].astype(jnp.bfloat16)
    acc = jnp.dot(x_bf16, w_ref[...], preferred_element_type=jnp.float32)
    acc = acc + b_ref[...]                       # broadcast (1, tn) over rows
    o_ref[...] = jnp.maximum(acc, 0.0).astype(o_ref.dtype)


@functools.partial(jax.jit, static_argnames=("tn",))
def _forward_impl(x2d, w_t, b2, *, tn):
    m = x2d.shape[0]
    grid = (NUM_H1 // tn,)
    # Advisory cost estimate; x counted once (grid-invariant block), weights dominate bytes.
    flops = 2 * m * D_IN * NUM_H1
    bytes_accessed = (w_t.size * 2        # bf16 weights
                      + x2d.size * 4      # f32 activations, read once
                      + m * NUM_H1 * 4    # f32 output
                      + NUM_H1 * 4)       # f32 bias
    return pl.pallas_call(
        _linear_relu_kernel,
        out_shape=jax.ShapeDtypeStruct((m, NUM_H1), jnp.float32),
        grid_spec=pltpu.PrefetchScalarGridSpec(
            num_scalar_prefetch=0,
            grid=grid,
            in_specs=[
                # Constant index_map: x is copied once and stays resident across N tiles.
                pl.BlockSpec((m, D_IN), lambda j: (0, 0)),
                pl.BlockSpec((D_IN, tn), lambda j: (0, j)),   # weight column tile
                pl.BlockSpec((1, tn), lambda j: (0, j)),      # bias tile
            ],
            out_specs=pl.BlockSpec((m, tn), lambda j: (0, j)),
        ),
        compiler_params=pltpu.CompilerParams(
            dimension_semantics=("parallel",),   # lets v7x shard the 2 N tiles across its TCs
        ),
        cost_estimate=pl.CostEstimate(
            flops=flops, transcendentals=0, bytes_accessed=bytes_accessed),
    )(x2d, w_t, b2)


def forward_in_h1(x, w_t, b, *, tn=None):
    """x: any shape whose trailing dims multiply to 784 (e.g. (B,1,28,28) or (B,784)).
    w_t: (784, 1024) bfloat16 transposed nn.Linear weight (see prepare_weights).
    b:   (1024,) float32.  Returns relu(x @ W.T + b) as (B, 1024) float32."""
    if tn is None:
        tn = _default_tn()
    assert NUM_H1 % tn == 0 and tn % 128 == 0
    # x.view(-1, 28*28); x.float().  Reshape is metadata-only and astype is a no-op for
    # f32 inputs; the bf16 cast and all padding/slicing concerns live inside the kernel,
    # so there are no extra standalone XLA launches around the pallas_call.
    x2d = x.reshape(-1, D_IN).astype(jnp.float32)
    b2 = b.reshape(1, NUM_H1).astype(jnp.float32)
    return _forward_impl(x2d, w_t, b2, tn=tn)
    # TODO(synk): with more layers, fuse them into this pallas_call (all MLP weights fit
    # VMEM) or keep w_t resident via a cross-call VMEM/semaphore future; add an M grid
    # axis (tm ~256-512) and re-check v7x's 32 MiB scoped VMEM once batches reach
    # thousands of rows.


def init_params(key):
    # Deterministic init matching nn.Linear(784, 1024):
    # weight (1024, 784), bias (1024,), uniform(-1/sqrt(784), 1/sqrt(784)).
    kw, kb = jax.random.split(key)
    bound = 1.0 / (D_IN ** 0.5)
    w = jax.random.uniform(kw, (NUM_H1, D_IN), jnp.float32, -bound, bound)
    b = jax.random.uniform(kb, (NUM_H1,), jnp.float32, -bound, bound)
    return w, b


def prepare_weights(w):
    """(1024, 784) f32 nn.Linear weight -> (784, 1024) bf16 transpose.
    No K zero-pad: 784 is the full K extent (and a multiple of 16 for bf16 sublane
    packing), so BlockSpecs remain legal and we skip streaming 112 rows of zeros
    (~12.5% of weight bytes) on every call; Mosaic masks the ragged last MXU pass."""
    return w.T.astype(jnp.bfloat16)


if __name__ == "__main__":
    key = jax.random.PRNGKey(0)
    kx, kp = jax.random.split(key)
    # MNIST-like input: (batch, 1, 28, 28) -> view(-1, 784)
    x = jax.random.normal(kx, (2, 1, 28, 28), jnp.float32)
    w, b = init_params(kp)
    w_t = prepare_weights(w)

    out = forward_in_h1(x, w_t, b)
    out = jax.block_until_ready(out)

    # Reference in plain JAX (full f32); bf16 weights/activations => looser tolerance.
    # Keep this check: correctness of the un-padded K=784 path relies on Mosaic's
    # masking of the ragged contraction.
    ref = jnp.maximum(x.reshape(-1, D_IN) @ w.T + b, 0.0)
    assert out.shape == (2, NUM_H1)
    err = float(jnp.max(jnp.abs(out - ref)))
    assert jnp.allclose(out, ref, atol=5e-2, rtol=5e-2), err
    print("KERNEL_OK")
</pallas_src>

<mosaic_0001>
module attributes {stable_mosaic.version = 11 : i64} {
  func.func @_linear_relu_kernel(%arg0: i32, %arg1: memref<2x784xf32, #tpu.memory_space<vmem>>, %arg2: memref<784x1024xbf16, #tpu.memory_space<vmem>>, %arg3: memref<1x1024xf32, #tpu.memory_space<vmem>>, %arg4: memref<2x1024xf32, #tpu.memory_space<vmem>>) attributes {dimension_semantics = [#tpu.dimension_semantics<parallel>], iteration_bounds = array<i64: 1>, scalar_prefetch = 0 : i64, scratch_operands = 0 : i64, tpu.core_type = #tpu.core_type<tc>, window_params = [{pipeline_mode = #tpu.pipeline_mode<synchronous>, transform_indices = @transform_0, window_bounds = array<i64: 2, 784>}, {transform_indices = @transform_1, window_bounds = array<i64: 784, 1024>}, {transform_indices = @transform_2, window_bounds = array<i64: 1, 1024>}, {transform_indices = @transform_3, window_bounds = array<i64: 2, 1024>}]} {
    %c0 = arith.constant 0 : index
    %c0_0 = arith.constant 0 : index
    %0 = vector.load %arg1[%c0, %c0_0] : memref<2x784xf32, #tpu.memory_space<vmem>>, vector<2x784xf32>
    %1 = arith.truncf %0 : vector<2x784xf32> to vector<2x784xbf16>
    %c0_1 = arith.constant 0 : index
    %c0_2 = arith.constant 0 : index
    %2 = vector.load %arg2[%c0_1, %c0_2] : memref<784x1024xbf16, #tpu.memory_space<vmem>>, vector<784x1024xbf16>
    %cst = arith.constant dense<0.000000e+00> : vector<2x1024xf32>
    %3 = tpu.matmul %1, %2, %cst {dimension_numbers = #tpu.dot_dimension_numbers<[1], [0], [0], [1], [0, 0, 1, 1], [], []>} : vector<2x784xbf16>, vector<784x1024xbf16>, vector<2x1024xf32> -> vector<2x1024xf32>
    %c0_3 = arith.constant 0 : index
    %c0_4 = arith.constant 0 : index
    %4 = vector.load %arg3[%c0_3, %c0_4] : memref<1x1024xf32, #tpu.memory_space<vmem>>, vector<1x1024xf32>
    %5 = vector.broadcast %4 : vector<1x1024xf32> to vector<2x1024xf32>
    %6 = arith.addf %3, %5 : vector<2x1024xf32>
    %cst_5 = arith.constant 0.000000e+00 : f32
    %7 = vector.broadcast %cst_5 : f32 to vector<2x1024xf32>
    %8 = arith.maximumf %6, %7 : vector<2x1024xf32>
    %c0_6 = arith.constant 0 : index
    %c0_7 = arith.constant 0 : index
    %9 = vector.load %arg4[%c0_6, %c0_7] : memref<2x1024xf32, #tpu.memory_space<vmem>>, vector<2x1024xf32>
    tpu.vector_store %arg4[%c0_6, %c0_7], %8 {strides = array<i32>} : memref<2x1024xf32, #tpu.memory_space<vmem>>, vector<2x1024xf32>,
    return
  }
  func.func @transform_0(%arg0: i32) -> (i32, i32) {
    %c0_i32 = arith.constant 0 : i32
    %c0_i32_0 = arith.constant 0 : i32
    %c0_i32_1 = arith.constant 0 : i32
    return %c0_i32, %c0_i32_0 : i32, i32
  }
  func.func @transform_1(%arg0: i32) -> (i32, i32) {
    %c0_i32 = arith.constant 0 : i32
    %c0_i32_0 = arith.constant 0 : i32
    return %c0_i32, %arg0 : i32, i32
  }
  func.func @transform_2(%arg0: i32) -> (i32, i32) {
    %c0_i32 = arith.constant 0 : i32
    %c0_i32_0 = arith.constant 0 : i32
    return %c0_i32, %arg0 : i32, i32
  }
  func.func @transform_3(%arg0: i32) -> (i32, i32) {
    %c0_i32 = arith.constant 0 : i32
    %c0_i32_0 = arith.constant 0 : i32
    return %c0_i32, %arg0 : i32, i32
  }
}

</mosaic_0001>

<llo_original>
// kernel: _forward_impl.1
$region0: #{_forward_impl.1}
  #allocation0 [shape = 'u32[]', space=smem, size = 0x4, offset = 0x4, fixed_abs, tag = 'smem constant byte address 0x4 - core index']
  #allocation1 [shape = 'u32[72,128]{1,0:T(1,128)}', space=vmem, size = 0x9000, scoped, tag = 'internal scratch']
  %s0 = inlined_call_operand.hbm [shape: f32[2,784], index: 0, kind: input, shape index: {}]
  %s1 = inlined_call_operand.hbm [shape: bf16[784,1024], index: 1, kind: input, shape index: {}]
  %s2 = inlined_call_operand.hbm [shape: f32[1,1024], index: 2, kind: input, shape index: {}]
  %s3 = inlined_call_operand.hbm [shape: f32[2,1024], index: 3, kind: output, shape index: {}]
  %s4 = sld [smem:[#allocation0]]
  $region34: #{_forward_impl.1} parent=0
    _
  %s6 = ssub.s32 1, %s4
  %s7 = scalar_select 0, %s6, %s4
  $region1: #{_forward_impl.1} parent=0
    #allocation2 [shape = 'u8[7168]{0}', space=vmem, size = 0x1c00, scoped, tag = 'input window, operand 0, single buffered']
    #allocation3 [shape = 's32[1]{0}', space=sflag, size = 0x4, scoped, tag = 'scoped memory for _forward_impl.1']
    #allocation4 [shape = 's32[1]{0}', space=sflag, size = 0x4, scoped, tag = 'scoped memory for _forward_impl.1']
    #allocation5 [shape = 'u8[1605632]{0}', space=vmem, size = 0x188000, scoped, tag = 'input window, operand 1, single buffered']
    #allocation6 [shape = 's32[1]{0}', space=sflag, size = 0x4, scoped, tag = 'scoped memory for _forward_impl.1']
    #allocation7 [shape = 'u8[4096]{0}', space=vmem, size = 0x1000, scoped, tag = 'input window, operand 2, single buffered']
    #allocation8 [shape = 'u8[8192]{0}', space=vmem, size = 0x2000, scoped, tag = 'output window, operand 0, single buffered']
    %8 = vsyncpa [#allocation3], 0
    %9 = vsyncpa [#allocation6], 0
    %10 = vsyncpa [#allocation4], 0
    // Predicated region
    $region2: #{_forward_impl.1} parent=1 // pred_check
      _
    $region3: #{_forward_impl.1} parent=1 // pred_check_branch
      %12 = sbr.rel (0) target = $region5
    $region4: #{_forward_impl.1} parent=1 // pred_region
      %14 = vsyncadd [#allocation3], 0
      %s16 = sshll.u32 %s0, 4
      %s17 = int_to_ptr.hbm [resolvable:$true] %s16
      %s18 = sshll.u32 [#allocation2], 4
      %s19 = int_to_ptr.vmem [resolvable:$true] %s18
      %21 = dma.hbm_to_vmem [thread:$0]  %s17, 224, %s19, [#allocation3]
    $region5: #{_forward_impl.1} parent=1 // pred_fallthru
      _
    // Predicated region
    $region6: #{_forward_impl.1} parent=1 // pred_check
      _
    $region7: #{_forward_impl.1} parent=1 // pred_check_branch
      %23 = sbr.rel (0) target = $region9
    $region8: #{_forward_impl.1} parent=1 // pred_region
      %25 = vsyncadd [#allocation6], 0
      %s26 = sshll.u32 %s1, 4
      %s27 = int_to_ptr.hbm [resolvable:$true] %s26
      %s28 = sshll.u32 [#allocation5], 4
      %s29 = int_to_ptr.vmem [resolvable:$true] %s28
      %34 = dma.hbm_to_vmem [thread:$0]  %s27, 50176, %s29, [#allocation6], 512, 512, 32
    $region9: #{_forward_impl.1} parent=1 // pred_fallthru
      _
    // Predicated region
    $region10: #{_forward_impl.1} parent=1 // pred_check
      _
    $region11: #{_forward_impl.1} parent=1 // pred_check_branch
      %36 = sbr.rel (0) target = $region13
    $region12: #{_forward_impl.1} parent=1 // pred_region
      %38 = vsyncadd [#allocation6], 0
      %s40 = sshll.u32 %s2, 4
      %s41 = int_to_ptr.hbm [resolvable:$true] %s40
      %s42 = sshll.u32 [#allocation7], 4
      %s43 = int_to_ptr.vmem [resolvable:$true] %s42
      %45 = dma.hbm_to_vmem [thread:$0]  %s41, 128, %s43, [#allocation6]
    $region13: #{_forward_impl.1} parent=1 // pred_fallthru
      _
    // Predicated region
    $region14: #{_forward_impl.1} parent=1 // pred_check
      _
    $region15: #{_forward_impl.1} parent=1 // pred_check_branch
      %47 = sbr.rel (0) target = $region17
    $region16: #{_forward_impl.1} parent=1 // pred_region
      %49 = dma.done [#allocation3], 224
    $region17: #{_forward_impl.1} parent=1 // pred_fallthru
      _
    // Predicated region
    $region18: #{_forward_impl.1} parent=1 // pred_check
      _
    $region19: #{_forward_impl.1} parent=1 // pred_check_branch
      %51 = sbr.rel (0) target = $region21
    $region20: #{_forward_impl.1} parent=1 // pred_region
      %53 = dma.done [#allocation6], 50176
    $region21: #{_forward_impl.1} parent=1 // pred_fallthru
      _
    // Predicated region
    $region22: #{_forward_impl.1} parent=1 // pred_check
      _
    $region23: #{_forward_impl.1} parent=1 // pred_check_branch
      %55 = sbr.rel (0) target = $region25
    $region24: #{_forward_impl.1} parent=1 // pred_region
      %57 = dma.done [#allocation6], 128
    $region25: #{_forward_impl.1} parent=1 // pred_fallthru
      _
    %v59 = vld [vmem:[#allocation2] sm:$0xff]
    %v60 = vld [vmem:[#allocation2 + $0x8] sm:$0x3f]
    %63 = vst [vmem:[#allocation1] ss:$4 sm:$0xff] %v59
    %s64 = scalar_lea.vmem [#allocation1], 32
    %65 = vst [vmem:[%s64] ss:$4 sm:$0xff] %v60
    %v66 = vld.sshfl [vmem:[#allocation1] sm:$0xff pattern:$0x73625140]
    %v67 = vld.sshfl [vmem:[#allocation1 + $0x8] sm:$0xff pattern:$0x73625140]
    %v68 = vld.sshfl [vmem:[#allocation1 + $0x10] sm:$0xff pattern:$0x73625140]
    %v69 = vld.sshfl [vmem:[#allocation1 + $0x18] sm:$0xff pattern:$0x73625140]
    %v70 = vld.sshfl [vmem:[#allocation1 + $0x20] sm:$0xff pattern:$0x73625140]
    %v71 = vld.sshfl [vmem:[#allocation1 + $0x28] sm:$0xff pattern:$0x73625140]
    %v72 = vld.sshfl [vmem:[#allocation1 + $0x30] sm:$0xff pattern:$0x73625140]
    %v80 = vpack.c.bf16 %v66, %v66
    %v81 = vpack.c.bf16 %v67, %v67
    %v82 = vpack.c.bf16 %v68, %v68
    %v83 = vpack.c.bf16 %v69, %v69
    %v84 = vpack.c.bf16 %v70, %v70
    %v85 = vpack.c.bf16 %v71, %v71
    %v86 = vpack.c.bf16 %v72, %v72
    %v87 = vld [vmem:[#allocation5] sm:$0xff]
    %v88 = vld [vmem:[#allocation5 + $0x8] sm:$0xff]
    %v89 = vld [vmem:[#allocation5 + $0x10] sm:$0xff]
    %v90 = vld [vmem:[#allocation5 + $0x18] sm:$0xff]
    %v91 = vld [vmem:[#allocation5 + $0x20] sm:$0xff]
    %v92 = vld [vmem:[#allocation5 + $0x28] sm:$0xff]
    %v93 = vld [vmem:[#allocation5 + $0x30] sm:$0xff]
    %v94 = vld [vmem:[#allocation5 + $0x38] sm:$0xff]
    %v95 = vld [vmem:[#allocation5 + $0x40] sm:$0xff]
    %v96 = vld [vmem:[#allocation5 + $0x48] sm:$0xff]
    %v97 = vld [vmem:[#allocation5 + $0x50] sm:$0xff]
    %v98 = vld [vmem:[#allocation5 + $0x58] sm:$0xff]
    %v99 = vld [vmem:[#allocation5 + $0x60] sm:$0xff]
    %v100 = vld [vmem:[#allocation5 + $0x68] sm:$0xff]
    %v101 = vld [vmem:[#allocation5 + $0x70] sm:$0xff]
    %v102 = vld [vmem:[#allocation5 + $0x78] sm:$0xff]
    %v103 = vld [vmem:[#allocation5 + $0x80] sm:$0xff]
    %v104 = vld [vmem:[#allocation5 + $0x88] sm:$0xff]
    %v105 = vld [vmem:[#allocation5 + $0x90] sm:$0xff]
    %v106 = vld [vmem:[#allocation5 + $0x98] sm:$0xff]
    %v107 = vld [vmem:[#allocation5 + $0xa0] sm:$0xff]
    %v108 = vld [vmem:[#allocation5 + $0xa8] sm:$0xff]
    %v109 = vld [vmem:[#allocation5 + $0xb0] sm:$0xff]
    %v110 = vld [vmem:[#allocation5 + $0xb8] sm:$0xff]
    %v111 = vld [vmem:[#allocation5 + $0xc0] sm:$0xff]
    %v112 = vld [vmem:[#allocation5 + $0xc8] sm:$0xff]
    %v113 = vld [vmem:[#allocation5 + $0xd0] sm:$0xff]
    %v114 = vld [vmem:[#allocation5 + $0xd8] sm:$0xff]
    %v115 = vld [vmem:[#allocation5 + $0xe0] sm:$0xff]
    %v116 = vld [vmem:[#allocation5 + $0xe8] sm:$0xff]
    %v117 = vld [vmem:[#allocation5 + $0xf0] sm:$0xff]
    %v118 = vld [vmem:[#allocation5 + $0xf8] sm:$0xff]
    %v119 = vld [vmem:[#allocation5 + $0x100] sm:$0xff]
    %v120 = vld [vmem:[#allocation5 + $0x108] sm:$0xff]
    %v121 = vld [vmem:[#allocation5 + $0x110] sm:$0xff]
    %v122 = vld [vmem:[#allocation5 + $0x118] sm:$0xff]
    %v123 = vld [vmem:[#allocation5 + $0x120] sm:$0xff]
    %v124 = vld [vmem:[#allocation5 + $0x128] sm:$0xff]
    %v125 = vld [vmem:[#allocation5 + $0x130] sm:$0xff]
    %v126 = vld [vmem:[#allocation5 + $0x138] sm:$0xff]
    %v127 = vld [vmem:[#allocation5 + $0x140] sm:$0xff]
    %v128 = vld [vmem:[#allocation5 + $0x148] sm:$0xff]
    %v129 = vld [vmem:[#allocation5 + $0x150] sm:$0xff]
    %v130 = vld [vmem:[#allocation5 + $0x158] sm:$0xff]
    %v131 = vld [vmem:[#allocation5 + $0x160] sm:$0xff]
    %v132 = vld [vmem:[#allocation5 + $0x168] sm:$0xff]
    %v133 = vld [vmem:[#allocation5 + $0x170] sm:$0xff]
    %v134 = vld [vmem:[#allocation5 + $0x178] sm:$0xff]
    %v135 = vld [vmem:[#allocation5 + $0x180] sm:$0xff]
    %v136 = vld [vmem:[#allocation5 + $0x188] sm:$0xff]
    %v137 = vld [vmem:[#allocation5 + $0x190] sm:$0xff]
    %v138 = vld [vmem:[#allocation5 + $0x198] sm:$0xff]
    %v139 = vld [vmem:[#allocation5 + $0x1a0] sm:$0xff]
    %v140 = vld [vmem:[#allocation5 + $0x1a8] sm:$0xff]
    %v141 = vld [vmem:[#allocation5 + $0x1b0] sm:$0xff]
    %v142 = vld [vmem:[#allocation5 + $0x1b8] sm:$0xff]
    %v143 = vld [vmem:[#allocation5 + $0x1c0] sm:$0xff]
    %v144 = vld [vmem:[#allocation5 + $0x1c8] sm:$0xff]
    %v145 = vld [vmem:[#allocation5 + $0x1d0] sm:$0xff]
    %v146 = vld [vmem:[#allocation5 + $0x1d8] sm:$0xff]
    %v147 = vld [vmem:[#allocation5 + $0x1e0] sm:$0xff]
    %v148 = vld [vmem:[#allocation5 + $0x1e8] sm:$0xff]
    %v149 = vld [vmem:[#allocation5 + $0x1f0] sm:$0xff]
    %v150 = vld [vmem:[#allocation5 + $0x1f8] sm:$0xff]
    %v151 = vld [vmem:[#allocation5 + $0x200] sm:$0xff]
    %v152 = vld [vmem:[#allocation5 + $0x208] sm:$0xff]
    %v153 = vld [vmem:[#allocation5 + $0x210] sm:$0xff]
    %v154 = vld [vmem:[#allocation5 + $0x218] sm:$0xff]
    %v155 = vld [vmem:[#allocation5 + $0x220] sm:$0xff]
    %v156 = vld [vmem:[#allocation5 + $0x228] sm:$0xff]
    %v157 = vld [vmem:[#allocation5 + $0x230] sm:$0xff]
    %v158 = vld [vmem:[#allocation5 + $0x238] sm:$0xff]
    %v159 = vld [vmem:[#allocation5 + $0x240] sm:$0xff]
    %v160 = vld [vmem:[#allocation5 + $0x248] sm:$0xff]
    %v161 = vld [vmem:[#allocation5 + $0x250] sm:$0xff]
    %v162 = vld [vmem:[#allocation5 + $0x258] sm:$0xff]
    %v163 = vld [vmem:[#allocation5 + $0x260] sm:$0xff]
    %v164 = vld [vmem:[#allocation5 + $0x268] sm:$0xff]
    %v165 = vld [vmem:[#allocation5 + $0x270] sm:$0xff]
    %v166 = vld [vmem:[#allocation5 + $0x278] sm:$0xff]
    %v167 = vld [vmem:[#allocation5 + $0x280] sm:$0xff]
    %v168 = vld [vmem:[#allocation5 + $0x288] sm:$0xff]
    %v169 = vld [vmem:[#allocation5 + $0x290] sm:$0xff]
    %v170 = vld [vmem:[#allocation5 + $0x298] sm:$0xff]
    %v171 = vld [vmem:[#allocation5 + $0x2a0] sm:$0xff]
    %v172 = vld [vmem:[#allocation5 + $0x2a8] sm:$0xff]
    %v173 = vld [vmem:[#allocation5 + $0x2b0] sm:$0xff]
    %v174 = vld [vmem:[#allocation5 + $0x2b8] sm:$0xff]
    %v175 = vld [vmem:[#allocation5 + $0x2c0] sm:$0xff]
    %v176 = vld [vmem:[#allocation5 + $0x2c8] sm:$0xff]
    %v177 = vld [vmem:[#allocation5 + $0x2d0] sm:$0xff]
    %v178 = vld [vmem:[#allocation5 + $0x2d8] sm:$0xff]
    %v179 = vld [vmem:[#allocation5 + $0x2e0] sm:$0xff]
    %v180 = vld [vmem:[#allocation5 + $0x2e8] sm:$0xff]
    %v181 = vld [vmem:[#allocation5 + $0x2f0] sm:$0xff]
    %v182 = vld [vmem:[#allocation5 + $0x2f8] sm:$0xff]
    %v183 = vld [vmem:[#allocation5 + $0x300] sm:$0xff]
    %v184 = vld [vmem:[#allocation5 + $0x308] sm:$0xff]
    %v185 = vld [vmem:[#allocation5 + $0x310] sm:$0xff]
    %v186 = vld [vmem:[#allocation5 + $0x318] sm:$0xff]
    %v187 = vld [vmem:[#allocation5 + $0x320] sm:$0xff]
    %v188 = vld [vmem:[#allocation5 + $0x328] sm:$0xff]
    %v189 = vld [vmem:[#allocation5 + $0x330] sm:$0xff]
    %v190 = vld [vmem:[#allocation5 + $0x338] sm:$0xff]
    %v191 = vld [vmem:[#allocation5 + $0x340] sm:$0xff]
    %v192 = vld [vmem:[#allocation5 + $0x348] sm:$0xff]
    %v193 = vld [vmem:[#allocation5 + $0x350] sm:$0xff]
    %v194 = vld [vmem:[#allocation5 + $0x358] sm:$0xff]
    %v195 = vld [vmem:[#allocation5 + $0x360] sm:$0xff]
    %v196 = vld [vmem:[#allocation5 + $0x368] sm:$0xff]
    %v197 = vld [vmem:[#allocation5 + $0x370] sm:$0xff]
    %v198 = vld [vmem:[#allocation5 + $0x378] sm:$0xff]
    %v199 = vld [vmem:[#allocation5 + $0x380] sm:$0xff]
    %v200 = vld [vmem:[#allocation5 + $0x388] sm:$0xff]
    %v201 = vld [vmem:[#allocation5 + $0x390] sm:$0xff]
    %v202 = vld [vmem:[#allocation5 + $0x398] sm:$0xff]
    %v203 = vld [vmem:[#allocation5 + $0x3a0] sm:$0xff]
    %v204 = vld [vmem:[#allocation5 + $0x3a8] sm:$0xff]
    %v205 = vld [vmem:[#allocation5 + $0x3b0] sm:$0xff]
    %v206 = vld [vmem:[#allocation5 + $0x3b8] sm:$0xff]
    %v207 = vld [vmem:[#allocation5 + $0x3c0] sm:$0xff]
    %v208 = vld [vmem:[#allocation5 + $0x3c8] sm:$0xff]
    %v209 = vld [vmem:[#allocation5 + $0x3d0] sm:$0xff]
    %v210 = vld [vmem:[#allocation5 + $0x3d8] sm:$0xff]
    %v211 = vld [vmem:[#allocation5 + $0x3e0] sm:$0xff]
    %v212 = vld [vmem:[#allocation5 + $0x3e8] sm:$0xff]
    %v213 = vld [vmem:[#allocation5 + $0x3f0] sm:$0xff]
    %v214 = vld [vmem:[#allocation5 + $0x3f8] sm:$0xff]
    %v215 = vld [vmem:[#allocation5 + $0x400] sm:$0xff]
    %v216 = vld [vmem:[#allocation5 + $0x408] sm:$0xff]
    %v217 = vld [vmem:[#allocation5 + $0x410] sm:$0xff]
    %v218 = vld [vmem:[#allocation5 + $0x418] sm:$0xff]
    %v219 = vld [vmem:[#allocation5 + $0x420] sm:$0xff]
    %v220 = vld [vmem:[#allocation5 + $0x428] sm:$0xff]
    %v221 = vld [vmem:[#allocation5 + $0x430] sm:$0xff]
    %v222 = vld [vmem:[#allocation5 + $0x438] sm:$0xff]
    %v223 = vld [vmem:[#allocation5 + $0x440] sm:$0xff]
    %v224 = vld [vmem:[#allocation5 + $0x448] sm:$0xff]
    %v225 = vld [vmem:[#allocation5 + $0x450] sm:$0xff]
    %v226 = vld [vmem:[#allocation5 + $0x458] sm:$0xff]
    %v227 = vld [vmem:[#allocation5 + $0x460] sm:$0xff]
    %v228 = vld [vmem:[#allocation5 + $0x468] sm:$0xff]
    %v229 = vld [vmem:[#allocation5 + $0x470] sm:$0xff]
    %v230 = vld [vmem:[#allocation5 + $0x478] sm:$0xff]
    %v231 = vld [vmem:[#allocation5 + $0x480] sm:$0xff]
    %v232 = vld [vmem:[#allocation5 + $0x488] sm:$0xff]
    %v233 = vld [vmem:[#allocation5 + $0x490] sm:$0xff]
    %v234 = vld [vmem:[#allocation5 + $0x498] sm:$0xff]
    %v235 = vld [vmem:[#allocation5 + $0x4a0] sm:$0xff]
    %v236 = vld [vmem:[#allocation5 + $0x4a8] sm:$0xff]
    %v237 = vld [vmem:[#allocation5 + $0x4b0] sm:$0xff]
    %v238 = vld [vmem:[#allocation5 + $0x4b8] sm:$0xff]
    %v239 = vld [vmem:[#allocation5 + $0x4c0] sm:$0xff]
    %v240 = vld [vmem:[#allocation5 + $0x4c8] sm:$0xff]
    %v241 = vld [vmem:[#allocation5 + $0x4d0] sm:$0xff]
    %v242 = vld [vmem:[#allocation5 + $0x4d8] sm:$0xff]
    %v243 = vld [vmem:[#allocation5 + $0x4e0] sm:$0xff]
    %v244 = vld [vmem:[#allocation5 + $0x4e8] sm:$0xff]
    %v245 = vld [vmem:[#allocation5 + $0x4f0] sm:$0xff]
    %v246 = vld [vmem:[#allocation5 + $0x4f8] sm:$0xff]
    %v247 = vld [vmem:[#allocation5 + $0x500] sm:$0xff]
    %v248 = vld [vmem:[#allocation5 + $0x508] sm:$0xff]
    %v249 = vld [vmem:[#allocation5 + $0x510] sm:$0xff]
    %v250 = vld [vmem:[#allocation5 + $0x518] sm:$0xff]
    %v251 = vld [vmem:[#allocation5 + $0x520] sm:$0xff]
    %v252 = vld [vmem:[#allocation5 + $0x528] sm:$0xff]
    %v253 = vld [vmem:[#allocation5 + $0x530] sm:$0xff]
    %v254 = vld [vmem:[#allocation5 + $0x538] sm:$0xff]
    %v255 = vld [vmem:[#allocation5 + $0x540] sm:$0xff]
    %v256 = vld [vmem:[#allocation5 + $0x548] sm:$0xff]
    %v257 = vld [vmem:[#allocation5 + $0x550] sm:$0xff]
    %v258 = vld [vmem:[#allocation5 + $0x558] sm:$0xff]
    %v259 = vld [vmem:[#allocation5 + $0x560] sm:$0xff]
    %v260 = vld [vmem:[#allocation5 + $0x568] sm:$0xff]
    %v261 = vld [vmem:[#allocation5 + $0x570] sm:$0xff]
    %v262 = vld [vmem:[#allocation5 + $0x578] sm:$0xff]
    %v263 = vld [vmem:[#allocation5 + $0x580] sm:$0xff]
    %v264 = vld [vmem:[#allocation5 + $0x588] sm:$0xff]
    %v265 = vld [vmem:[#allocation5 + $0x590] sm:$0xff]
    %v266 = vld [vmem:[#allocation5 + $0x598] sm:$0xff]
    %v267 = vld [vmem:[#allocation5 + $0x5a0] sm:$0xff]
    %v268 = vld [vmem:[#allocation5 + $0x5a8] sm:$0xff]
    %v269 = vld [vmem:[#allocation5 + $0x5b0] sm:$0xff]
    %v270 = vld [vmem:[#allocation5 + $0x5b8] sm:$0xff]
    %v271 = vld [vmem:[#allocation5 + $0x5c0] sm:$0xff]
    %v272 = vld [vmem:[#allocation5 + $0x5c8] sm:$0xff]
    %v273 = vld [vmem:[#allocation5 + $0x5d0] sm:$0xff]
    %v274 = vld [vmem:[#allocation5 + $0x5d8] sm:$0xff]
    %v275 = vld [vmem:[#allocation5 + $0x5e0] sm:$0xff]
    %v276 = vld [vmem:[#allocation5 + $0x5e8] sm:$0xff]
    %v277 = vld [vmem:[#allocation5 + $0x5f0] sm:$0xff]
    %v278 = vld [vmem:[#allocation5 + $0x5f8] sm:$0xff]
    %v279 = vld [vmem:[#allocation5 + $0x600] sm:$0xff]
    %v280 = vld [vmem:[#allocation5 + $0x608] sm:$0xff]
    %v281 = vld [vmem:[#allocation5 + $0x610] sm:$0xff]
    %v282 = vld [vmem:[#allocation5 + $0x618] sm:$0xff]
    %v283 = vld [vmem:[#allocation5 + $0x620] sm:$0xff]
    %v284 = vld [vmem:[#allocation5 + $0x628] sm:$0xff]
    %v285 = vld [vmem:[#allocation5 + $0x630] sm:$0xff]
    %v286 = vld [vmem:[#allocation5 + $0x638] sm:$0xff]
    %v287 = vld [vmem:[#allocation5 + $0x640] sm:$0xff]
    %v288 = vld [vmem:[#allocation5 + $0x648] sm:$0xff]
    %v289 = vld [vmem:[#allocation5 + $0x650] sm:$0xff]
    %v290 = vld [vmem:[#allocation5 + $0x658] sm:$0xff]
    %v291 = vld [vmem:[#allocation5 + $0x660] sm:$0xff]
    %v292 = vld [vmem:[#allocation5 + $0x668] sm:$0xff]
    %v293 = vld [vmem:[#allocation5 + $0x670] sm:$0xff]
    %v294 = vld [vmem:[#allocation5 + $0x678] sm:$0xff]
    %v295 = vld [vmem:[#allocation5 + $0x680] sm:$0xff]
    %v296 = vld [vmem:[#allocation5 + $0x688] sm:$0xff]
    %v297 = vld [vmem:[#allocation5 + $0x690] sm:$0xff]
    %v298 = vld [vmem:[#allocation5 + $0x698] sm:$0xff]
    %v299 = vld [vmem:[#allocation5 + $0x6a0] sm:$0xff]
    %v300 = vld [vmem:[#allocation5 + $0x6a8] sm:$0xff]
    %v301 = vld [vmem:[#allocation5 + $0x6b0] sm:$0xff]
    %v302 = vld [vmem:[#allocation5 + $0x6b8] sm:$0xff]
    %v303 = vld [vmem:[#allocation5 + $0x6c0] sm:$0xff]
    %v304 = vld [vmem:[#allocation5 + $0x6c8] sm:$0xff]
    %v305 = vld [vmem:[#allocation5 + $0x6d0] sm:$0xff]
    %v306 = vld [vmem:[#allocation5 + $0x6d8] sm:$0xff]
    %v307 = vld [vmem:[#allocation5 + $0x6e0] sm:$0xff]
    %v308 = vld [vmem:[#allocation5 + $0x6e8] sm:$0xff]
    %v309 = vld [vmem:[#allocation5 + $0x6f0] sm:$0xff]
    %v310 = vld [vmem:[#allocation5 + $0x6f8] sm:$0xff]
    %v311 = vld [vmem:[#allocation5 + $0x700] sm:$0xff]
    %v312 = vld [vmem:[#allocation5 + $0x708] sm:$0xff]
    %v313 = vld [vmem:[#allocation5 + $0x710] sm:$0xff]
    %v314 = vld [vmem:[#allocation5 + $0x718] sm:$0xff]
    %v315 = vld [vmem:[#allocation5 + $0x720] sm:$0xff]
    %v316 = vld [vmem:[#allocation5 + $0x728] sm:$0xff]
    %v317 = vld [vmem:[#allocation5 + $0x730] sm:$0xff]
    %v318 = vld [vmem:[#allocation5 + $0x738] sm:$0xff]
    %v319 = vld [vmem:[#allocation5 + $0x740] sm:$0xff]
    %v320 = vld [vmem:[#allocation5 + $0x748] sm:$0xff]
    %v321 = vld [vmem:[#allocation5 + $0x750] sm:$0xff]
    %v322 = vld [vmem:[#allocation5 + $0x758] sm:$0xff]
    %v323 = vld [vmem:[#allocation5 + $0x760] sm:$0xff]
    %v324 = vld [vmem:[#allocation5 + $0x768] sm:$0xff]
    %v325 = vld [vmem:[#allocation5 + $0x770] sm:$0xff]
    %v326 = vld [vmem:[#allocation5 + $0x778] sm:$0xff]
    %v327 = vld [vmem:[#allocation5 + $0x780] sm:$0xff]
    %v328 = vld [vmem:[#allocation5 + $0x788] sm:$0xff]
    %v329 = vld [vmem:[#allocation5 + $0x790] sm:$0xff]
    %v330 = vld [vmem:[#allocation5 + $0x798] sm:$0xff]
    %v331 = vld [vmem:[#allocation5 + $0x7a0] sm:$0xff]
    %v332 = vld [vmem:[#allocation5 + $0x7a8] sm:$0xff]
    %v333 = vld [vmem:[#allocation5 + $0x7b0] sm:$0xff]
    %v334 = vld [vmem:[#allocation5 + $0x7b8] sm:$0xff]
    %v335 = vld [vmem:[#allocation5 + $0x7c0] sm:$0xff]
    %v336 = vld [vmem:[#allocation5 + $0x7c8] sm:$0xff]
    %v337 = vld [vmem:[#allocation5 + $0x7d0] sm:$0xff]
    %v338 = vld [vmem:[#allocation5 + $0x7d8] sm:$0xff]
    %v339 = vld [vmem:[#allocation5 + $0x7e0] sm:$0xff]
    %v340 = vld [vmem:[#allocation5 + $0x7e8] sm:$0xff]
    %v341 = vld [vmem:[#allocation5 + $0x7f0] sm:$0xff]
    %v342 = vld [vmem:[#allocation5 + $0x7f8] sm:$0xff]
    %v343 = vld [vmem:[#allocation5 + $0x800] sm:$0xff]
    %v344 = vld [vmem:[#allocation5 + $0x808] sm:$0xff]
    %v345 = vld [vmem:[#allocation5 + $0x810] sm:$0xff]
    %v346 = vld [vmem:[#allocation5 + $0x818] sm:$0xff]
    %v347 = vld [vmem:[#allocation5 + $0x820] sm:$0xff]
    %v348 = vld [vmem:[#allocation5 + $0x828] sm:$0xff]
    %v349 = vld [vmem:[#allocation5 + $0x830] sm:$0xff]
    %v350 = vld [vmem:[#allocation5 + $0x838] sm:$0xff]
    %v351 = vld [vmem:[#allocation5 + $0x840] sm:$0xff]
    %v352 = vld [vmem:[#allocation5 + $0x848] sm:$0xff]
    %v353 = vld [vmem:[#allocation5 + $0x850] sm:$0xff]
    %v354 = vld [vmem:[#allocation5 + $0x858] sm:$0xff]
    %v355 = vld [vmem:[#allocation5 + $0x860] sm:$0xff]
    %v356 = vld [vmem:[#allocation5 + $0x868] sm:$0xff]
    %v357 = vld [vmem:[#allocation5 + $0x870] sm:$0xff]
    %v358 = vld [vmem:[#allocation5 + $0x878] sm:$0xff]
    %v359 = vld [vmem:[#allocation5 + $0x880] sm:$0xff]
    %v360 = vld [vmem:[#allocation5 + $0x888] sm:$0xff]
    %v361 = vld [vmem:[#allocation5 + $0x890] sm:$0xff]
    %v362 = vld [vmem:[#allocation5 + $0x898] sm:$0xff]
    %v363 = vld [vmem:[#allocation5 + $0x8a0] sm:$0xff]
    %v364 = vld [vmem:[#allocation5 + $0x8a8] sm:$0xff]
    %v365 = vld [vmem:[#allocation5 + $0x8b0] sm:$0xff]
    %v366 = vld [vmem:[#allocation5 + $0x8b8] sm:$0xff]
    %v367 = vld [vmem:[#allocation5 + $0x8c0] sm:$0xff]
    %v368 = vld [vmem:[#allocation5 + $0x8c8] sm:$0xff]
    %v369 = vld [vmem:[#allocation5 + $0x8d0] sm:$0xff]
    %v370 = vld [vmem:[#allocation5 + $0x8d8] sm:$0xff]
    %v371 = vld [vmem:[#allocation5 + $0x8e0] sm:$0xff]
    %v372 = vld [vmem:[#allocation5 + $0x8e8] sm:$0xff]
    %v373 = vld [vmem:[#allocation5 + $0x8f0] sm:$0xff]
    %v374 = vld [vmem:[#allocation5 + $0x8f8] sm:$0xff]
    %v375 = vld [vmem:[#allocation5 + $0x900] sm:$0xff]
    %v376 = vld [vmem:[#allocation5 + $0x908] sm:$0xff]
    %v377 = vld [vmem:[#allocation5 + $0x910] sm:$0xff]
    %v378 = vld [vmem:[#allocation5 + $0x918] sm:$0xff]
    %v379 = vld [vmem:[#allocation5 + $0x920] sm:$0xff]
    %v380 = vld [vmem:[#allocation5 + $0x928] sm:$0xff]
    %v381 = vld [vmem:[#allocation5 + $0x930] sm:$0xff]
    %v382 = vld [vmem:[#allocation5 + $0x938] sm:$0xff]
    %v383 = vld [vmem:[#allocation5 + $0x940] sm:$0xff]
    %v384 = vld [vmem:[#allocation5 + $0x948] sm:$0xff]
    %v385 = vld [vmem:[#allocation5 + $0x950] sm:$0xff]
    %v386 = vld [vmem:[#allocation5 + $0x958] sm:$0xff]
    %v387 = vld [vmem:[#allocation5 + $0x960] sm:$0xff]
    %v388 = vld [vmem:[#allocation5 + $0x968] sm:$0xff]
    %v389 = vld [vmem:[#allocation5 + $0x970] sm:$0xff]
    %v390 = vld [vmem:[#allocation5 + $0x978] sm:$0xff]
    %v391 = vld [vmem:[#allocation5 + $0x980] sm:$0xff]
    %v392 = vld [vmem:[#allocation5 + $0x988] sm:$0xff]
    %v393 = vld [vmem:[#allocation5 + $0x990] sm:$0xff]
    %v394 = vld [vmem:[#allocation5 + $0x998] sm:$0xff]
    %v395 = vld [vmem:[#allocation5 + $0x9a0] sm:$0xff]
    %v396 = vld [vmem:[#allocation5 + $0x9a8] sm:$0xff]
    %v397 = vld [vmem:[#allocation5 + $0x9b0] sm:$0xff]
    %v398 = vld [vmem:[#allocation5 + $0x9b8] sm:$0xff]
    %v399 = vld [vmem:[#allocation5 + $0x9c0] sm:$0xff]
    %v400 = vld [vmem:[#allocation5 + $0x9c8] sm:$0xff]
    %v401 = vld [vmem:[#allocation5 + $0x9d0] sm:$0xff]
    %v402 = vld [vmem:[#allocation5 + $0x9d8] sm:$0xff]
    %v403 = vld [vmem:[#allocation5 + $0x9e0] sm:$0xff]
    %v404 = vld [vmem:[#allocation5 + $0x9e8] sm:$0xff]
    %v405 = vld [vmem:[#allocation5 + $0x9f0] sm:$0xff]
    %v406 = vld [vmem:[#allocation5 + $0x9f8] sm:$0xff]
    %v407 = vld [vmem:[#allocation5 + $0xa00] sm:$0xff]
    %v408 = vld [vmem:[#allocation5 + $0xa08] sm:$0xff]
    %v409 = vld [vmem:[#allocation5 + $0xa10] sm:$0xff]
    %v410 = vld [vmem:[#allocation5 + $0xa18] sm:$0xff]
    %v411 = vld [vmem:[#allocation5 + $0xa20] sm:$0xff]
    %v412 = vld [vmem:[#allocation5 + $0xa28] sm:$0xff]
    %v413 = vld [vmem:[#allocation5 + $0xa30] sm:$0xff]
    %v414 = vld [vmem:[#allocation5 + $0xa38] sm:$0xff]
    %v415 = vld [vmem:[#allocation5 + $0xa40] sm:$0xff]
    %v416 = vld [vmem:[#allocation5 + $0xa48] sm:$0xff]
    %v417 = vld [vmem:[#allocation5 + $0xa50] sm:$0xff]
    %v418 = vld [vmem:[#allocation5 + $0xa58] sm:$0xff]
    %v419 = vld [vmem:[#allocation5 + $0xa60] sm:$0xff]
    %v420 = vld [vmem:[#allocation5 + $0xa68] sm:$0xff]
    %v421 = vld [vmem:[#allocation5 + $0xa70] sm:$0xff]
    %v422 = vld [vmem:[#allocation5 + $0xa78] sm:$0xff]
    %v423 = vld [vmem:[#allocation5 + $0xa80] sm:$0xff]
    %v424 = vld [vmem:[#allocation5 + $0xa88] sm:$0xff]
    %v425 = vld [vmem:[#allocation5 + $0xa90] sm:$0xff]
    %v426 = vld [vmem:[#allocation5 + $0xa98] sm:$0xff]
    %v427 = vld [vmem:[#allocation5 + $0xaa0] sm:$0xff]
    %v428 = vld [vmem:[#allocation5 + $0xaa8] sm:$0xff]
    %v429 = vld [vmem:[#allocation5 + $0xab0] sm:$0xff]
    %v430 = vld [vmem:[#allocation5 + $0xab8] sm:$0xff]
    %v431 = vld [vmem:[#allocation5 + $0xac0] sm:$0xff]
    %v432 = vld [vmem:[#allocation5 + $0xac8] sm:$0xff]
    %v433 = vld [vmem:[#allocation5 + $0xad0] sm:$0xff]
    %v434 = vld [vmem:[#allocation5 + $0xad8] sm:$0xff]
    %v435 = vld [vmem:[#allocation5 + $0xae0] sm:$0xff]
    %v436 = vld [vmem:[#allocation5 + $0xae8] sm:$0xff]
    %v437 = vld [vmem:[#allocation5 + $0xaf0] sm:$0xff]
    %v438 = vld [vmem:[#allocation5 + $0xaf8] sm:$0xff]
    %v439 = vld [vmem:[#allocation5 + $0xb00] sm:$0xff]
    %v440 = vld [vmem:[#allocation5 + $0xb08] sm:$0xff]
    %v441 = vld [vmem:[#allocation5 + $0xb10] sm:$0xff]
    %v442 = vld [vmem:[#allocation5 + $0xb18] sm:$0xff]
    %v443 = vld [vmem:[#allocation5 + $0xb20] sm:$0xff]
    %v444 = vld [vmem:[#allocation5 + $0xb28] sm:$0xff]
    %v445 = vld [vmem:[#allocation5 + $0xb30] sm:$0xff]
    %v446 = vld [vmem:[#allocation5 + $0xb38] sm:$0xff]
    %v447 = vld [vmem:[#allocation5 + $0xb40] sm:$0xff]
    %v448 = vld [vmem:[#allocation5 + $0xb48] sm:$0xff]
    %v449 = vld [vmem:[#allocation5 + $0xb50] sm:$0xff]
    %v450 = vld [vmem:[#allocation5 + $0xb58] sm:$0xff]
    %v451 = vld [vmem:[#allocation5 + $0xb60] sm:$0xff]
    %v452 = vld [vmem:[#allocation5 + $0xb68] sm:$0xff]
    %v453 = vld [vmem:[#allocation5 + $0xb70] sm:$0xff]
    %v454 = vld [vmem:[#allocation5 + $0xb78] sm:$0xff]
    %v455 = vld [vmem:[#allocation5 + $0xb80] sm:$0xff]
    %v456 = vld [vmem:[#allocation5 + $0xb88] sm:$0xff]
    %v457 = vld [vmem:[#allocation5 + $0xb90] sm:$0xff]
    %v458 = vld [vmem:[#allocation5 + $0xb98] sm:$0xff]
    %v459 = vld [vmem:[#allocation5 + $0xba0] sm:$0xff]
    %v460 = vld [vmem:[#allocation5 + $0xba8] sm:$0xff]
    %v461 = vld [vmem:[#allocation5 + $0xbb0] sm:$0xff]
    %v462 = vld [vmem:[#allocation5 + $0xbb8] sm:$0xff]
    %v463 = vld [vmem:[#allocation5 + $0xbc0] sm:$0xff]
    %v464 = vld [vmem:[#allocation5 + $0xbc8] sm:$0xff]
    %v465 = vld [vmem:[#allocation5 + $0xbd0] sm:$0xff]
    %v466 = vld [vmem:[#allocation5 + $0xbd8] sm:$0xff]
    %v467 = vld [vmem:[#allocation5 + $0xbe0] sm:$0xff]
    %v468 = vld [vmem:[#allocation5 + $0xbe8] sm:$0xff]
    %v469 = vld [vmem:[#allocation5 + $0xbf0] sm:$0xff]
    %v470 = vld [vmem:[#allocation5 + $0xbf8] sm:$0xff]
    %v471 = vld [vmem:[#allocation5 + $0xc00] sm:$0xff]
    %v472 = vld [vmem:[#allocation5 + $0xc08] sm:$0xff]
    %v473 = vld [vmem:[#allocation5 + $0xc10] sm:$0xff]
    %v474 = vld [vmem:[#allocation5 + $0xc18] sm:$0xff]
    %v475 = vld [vmem:[#allocation5 + $0xc20] sm:$0xff]
    %v476 = vld [vmem:[#allocation5 + $0xc28] sm:$0xff]
    %v477 = vld [vmem:[#allocation5 + $0xc30] sm:$0xff]
    %v478 = vld [vmem:[#allocation5 + $0xc38] sm:$0xff]
    %v479 = vld [vmem:[#allocation7] sm:$0xff]
    %v481 = vperm.slane %v479, 0
    %v482 = vperm.slane %v479, 1
    %v483 = vperm.slane %v479, 2
    %v484 = vperm.slane %v479, 3
    %v485 = vperm.slane %v479, 4
    %v486 = vperm.slane %v479, 5
    %v487 = vperm.slane %v479, 6
    %v488 = vperm.slane %v479, 7
    %v889 = vunpack.c.l.b16 %v87
    %v890 = vunpack.c.h.b16 %v87
    %v891 = vunpack.c.l.b16 %v88
    %v892 = vunpack.c.h.b16 %v88
    %v893 = vunpack.c.l.b16 %v89
    %v894 = vunpack.c.h.b16 %v89
    %v895 = vunpack.c.l.b16 %v90
    %v896 = vunpack.c.h.b16 %v90
    %v897 = vunpack.c.l.b16 %v91
    %v898 = vunpack.c.h.b16 %v91
    %v899 = vunpack.c.l.b16 %v92
    %v900 = vunpack.c.h.b16 %v92
    %v901 = vunpack.c.l.b16 %v93
    %v902 = vunpack.c.h.b16 %v93
    %v903 = vunpack.c.l.b16 %v94
    %v904 = vunpack.c.h.b16 %v94
    %v905 = vunpack.c.l.b16 %v95
    %v906 = vunpack.c.h.b16 %v95
    %v907 = vunpack.c.l.b16 %v96
    %v908 = vunpack.c.h.b16 %v96
    %v909 = vunpack.c.l.b16 %v97
    %v910 = vunpack.c.h.b16 %v97
    %v911 = vunpack.c.l.b16 %v98
    %v912 = vunpack.c.h.b16 %v98
    %v913 = vunpack.c.l.b16 %v99
    %v914 = vunpack.c.h.b16 %v99
    %v915 = vunpack.c.l.b16 %v100
    %v916 = vunpack.c.h.b16 %v100
    %v917 = vunpack.c.l.b16 %v101
    %v918 = vunpack.c.h.b16 %v101
    %v919 = vunpack.c.l.b16 %v102
    %v920 = vunpack.c.h.b16 %v102
    %v921 = vunpack.c.l.b16 %v103
    %v922 = vunpack.c.h.b16 %v103
    %v923 = vunpack.c.l.b16 %v104
    %v924 = vunpack.c.h.b16 %v104
    %v925 = vunpack.c.l.b16 %v105
    %v926 = vunpack.c.h.b16 %v105
    %v927 = vunpack.c.l.b16 %v106
    %v928 = vunpack.c.h.b16 %v106
    %v929 = vunpack.c.l.b16 %v107
    %v930 = vunpack.c.h.b16 %v107
    %v931 = vunpack.c.l.b16 %v108
    %v932 = vunpack.c.h.b16 %v108
    %v933 = vunpack.c.l.b16 %v109
    %v934 = vunpack.c.h.b16 %v109
    %v935 = vunpack.c.l.b16 %v110
    %v936 = vunpack.c.h.b16 %v110
    %v937 = vunpack.c.l.b16 %v111
    %v938 = vunpack.c.h.b16 %v111
    %v939 = vunpack.c.l.b16 %v112
    %v940 = vunpack.c.h.b16 %v112
    %v941 = vunpack.c.l.b16 %v113
    %v942 = vunpack.c.h.b16 %v113
    %v943 = vunpack.c.l.b16 %v114
    %v944 = vunpack.c.h.b16 %v114
    %v945 = vunpack.c.l.b16 %v115
    %v946 = vunpack.c.h.b16 %v115
    %v947 = vunpack.c.l.b16 %v116
    %v948 = vunpack.c.h.b16 %v116
    %v949 = vunpack.c.l.b16 %v117
    %v950 = vunpack.c.h.b16 %v117
    %v951 = vunpack.c.l.b16 %v118
    %v952 = vunpack.c.h.b16 %v118
    %v953 = vunpack.c.l.b16 %v119
    %v954 = vunpack.c.h.b16 %v119
    %v955 = vunpack.c.l.b16 %v120
    %v956 = vunpack.c.h.b16 %v120
    %v957 = vunpack.c.l.b16 %v121
    %v958 = vunpack.c.h.b16 %v121
    %v959 = vunpack.c.l.b16 %v122
    %v960 = vunpack.c.h.b16 %v122
    %v961 = vunpack.c.l.b16 %v123
    %v962 = vunpack.c.h.b16 %v123
    %v963 = vunpack.c.l.b16 %v124
    %v964 = vunpack.c.h.b16 %v124
    %v965 = vunpack.c.l.b16 %v125
    %v966 = vunpack.c.h.b16 %v125
    %v967 = vunpack.c.l.b16 %v126
    %v968 = vunpack.c.h.b16 %v126
    %v969 = vunpack.c.l.b16 %v127
    %v970 = vunpack.c.h.b16 %v127
    %v971 = vunpack.c.l.b16 %v128
    %v972 = vunpack.c.h.b16 %v128
    %v973 = vunpack.c.l.b16 %v129
    %v974 = vunpack.c.h.b16 %v129
    %v975 = vunpack.c.l.b16 %v130
    %v976 = vunpack.c.h.b16 %v130
    %v977 = vunpack.c.l.b16 %v131
    %v978 = vunpack.c.h.b16 %v131
    %v979 = vunpack.c.l.b16 %v132
    %v980 = vunpack.c.h.b16 %v132
    %v981 = vunpack.c.l.b16 %v133
    %v982 = vunpack.c.h.b16 %v133
    %v983 = vunpack.c.l.b16 %v134
    %v984 = vunpack.c.h.b16 %v134
    %v985 = vunpack.c.l.b16 %v135
    %v986 = vunpack.c.h.b16 %v135
    %v987 = vunpack.c.l.b16 %v136
    %v988 = vunpack.c.h.b16 %v136
    %v989 = vunpack.c.l.b16 %v137
    %v990 = vunpack.c.h.b16 %v137
    %v991 = vunpack.c.l.b16 %v138
    %v992 = vunpack.c.h.b16 %v138
    %v993 = vunpack.c.l.b16 %v139
    %v994 = vunpack.c.h.b16 %v139
    %v995 = vunpack.c.l.b16 %v140
    %v996 = vunpack.c.h.b16 %v140
    %v997 = vunpack.c.l.b16 %v141
    %v998 = vunpack.c.h.b16 %v141
    %v999 = vunpack.c.l.b16 %v142
    %v1000 = vunpack.c.h.b16 %v142
    %v1001 = vunpack.c.l.b16 %v143
    %v1002 = vunpack.c.h.b16 %v143
    %v1003 = vunpack.c.l.b16 %v144
    %v1004 = vunpack.c.h.b16 %v144
    %v1005 = vunpack.c.l.b16 %v145
    %v1006 = vunpack.c.h.b16 %v145
    %v1007 = vunpack.c.l.b16 %v146
    %v1008 = vunpack.c.h.b16 %v146
    %v1009 = vunpack.c.l.b16 %v147
    %v1010 = vunpack.c.h.b16 %v147
    %v1011 = vunpack.c.l.b16 %v148
    %v1012 = vunpack.c.h.b16 %v148
    %v1013 = vunpack.c.l.b16 %v149
    %v1014 = vunpack.c.h.b16 %v149
    %v1015 = vunpack.c.l.b16 %v150
    %v1016 = vunpack.c.h.b16 %v150
    %v1017 = vunpack.c.l.b16 %v151
    %v1018 = vunpack.c.h.b16 %v151
    %v1019 = vunpack.c.l.b16 %v152
    %v1020 = vunpack.c.h.b16 %v152
    %v1021 = vunpack.c.l.b16 %v153
    %v1022 = vunpack.c.h.b16 %v153
    %v1023 = vunpack.c.l.b16 %v154
    %v1024 = vunpack.c.h.b16 %v154
    %v1025 = vunpack.c.l.b16 %v155
    %v1026 = vunpack.c.h.b16 %v155
    %v1027 = vunpack.c.l.b16 %v156
    %v1028 = vunpack.c.h.b16 %v156
    %v1029 = vunpack.c.l.b16 %v157
    %v1030 = vunpack.c.h.b16 %v157
    %v1031 = vunpack.c.l.b16 %v158
    %v1032 = vunpack.c.h.b16 %v158
    %v1033 = vunpack.c.l.b16 %v159
    %v1034 = vunpack.c.h.b16 %v159
    %v1035 = vunpack.c.l.b16 %v160
    %v1036 = vunpack.c.h.b16 %v160
    %v1037 = vunpack.c.l.b16 %v161
    %v1038 = vunpack.c.h.b16 %v161
    %v1039 = vunpack.c.l.b16 %v162
    %v1040 = vunpack.c.h.b16 %v162
    %v1041 = vunpack.c.l.b16 %v163
    %v1042 = vunpack.c.h.b16 %v163
    %v1043 = vunpack.c.l.b16 %v164
    %v1044 = vunpack.c.h.b16 %v164
    %v1045 = vunpack.c.l.b16 %v165
    %v1046 = vunpack.c.h.b16 %v165
    %v1047 = vunpack.c.l.b16 %v166
    %v1048 = vunpack.c.h.b16 %v166
    %v1049 = vunpack.c.l.b16 %v167
    %v1050 = vunpack.c.h.b16 %v167
    %v1051 = vunpack.c.l.b16 %v168
    %v1052 = vunpack.c.h.b16 %v168
    %v1053 = vunpack.c.l.b16 %v169
    %v1054 = vunpack.c.h.b16 %v169
    %v1055 = vunpack.c.l.b16 %v170
    %v1056 = vunpack.c.h.b16 %v170
    %v1057 = vunpack.c.l.b16 %v171
    %v1058 = vunpack.c.h.b16 %v171
    %v1059 = vunpack.c.l.b16 %v172
    %v1060 = vunpack.c.h.b16 %v172
    %v1061 = vunpack.c.l.b16 %v173
    %v1062 = vunpack.c.h.b16 %v173
    %v1063 = vunpack.c.l.b16 %v174
    %v1064 = vunpack.c.h.b16 %v174
    %v1065 = vunpack.c.l.b16 %v175
    %v1066 = vunpack.c.h.b16 %v175
    %v1067 = vunpack.c.l.b16 %v176
    %v1068 = vunpack.c.h.b16 %v176
    %v1069 = vunpack.c.l.b16 %v177
    %v1070 = vunpack.c.h.b16 %v177
    %v1071 = vunpack.c.l.b16 %v178
    %v1072 = vunpack.c.h.b16 %v178
    %v1073 = vunpack.c.l.b16 %v179
    %v1074 = vunpack.c.h.b16 %v179
    %v1075 = vunpack.c.l.b16 %v180
    %v1076 = vunpack.c.h.b16 %v180
    %v1077 = vunpack.c.l.b16 %v181
    %v1078 = vunpack.c.h.b16 %v181
    %v1079 = vunpack.c.l.b16 %v182
    %v1080 = vunpack.c.h.b16 %v182
    %v1081 = vunpack.c.l.b16 %v183
    %v1082 = vunpack.c.h.b16 %v183
    %v1083 = vunpack.c.l.b16 %v184
    %v1084 = vunpack.c.h.b16 %v184
    %v1085 = vunpack.c.l.b16 %v185
    %v1086 = vunpack.c.h.b16 %v185
    %v1087 = vunpack.c.l.b16 %v186
    %v1088 = vunpack.c.h.b16 %v186
    %v1089 = vunpack.c.l.b16 %v187
    %v1090 = vunpack.c.h.b16 %v187
    %v1091 = vunpack.c.l.b16 %v188
    %v1092 = vunpack.c.h.b16 %v188
    %v1093 = vunpack.c.l.b16 %v189
    %v1094 = vunpack.c.h.b16 %v189
    %v1095 = vunpack.c.l.b16 %v190
    %v1096 = vunpack.c.h.b16 %v190
    %v1097 = vunpack.c.l.b16 %v191
    %v1098 = vunpack.c.h.b16 %v191
    %v1099 = vunpack.c.l.b16 %v192
    %v1100 = vunpack.c.h.b16 %v192
    %v1101 = vunpack.c.l.b16 %v193
    %v1102 = vunpack.c.h.b16 %v193
    %v1103 = vunpack.c.l.b16 %v194
    %v1104 = vunpack.c.h.b16 %v194
    %v1105 = vunpack.c.l.b16 %v195
    %v1106 = vunpack.c.h.b16 %v195
    %v1107 = vunpack.c.l.b16 %v196
    %v1108 = vunpack.c.h.b16 %v196
    %v1109 = vunpack.c.l.b16 %v197
    %v1110 = vunpack.c.h.b16 %v197
    %v1111 = vunpack.c.l.b16 %v198
    %v1112 = vunpack.c.h.b16 %v198
    %v1113 = vunpack.c.l.b16 %v199
    %v1114 = vunpack.c.h.b16 %v199
    %v1115 = vunpack.c.l.b16 %v200
    %v1116 = vunpack.c.h.b16 %v200
    %v1117 = vunpack.c.l.b16 %v201
    %v1118 = vunpack.c.h.b16 %v201
    %v1119 = vunpack.c.l.b16 %v202
    %v1120 = vunpack.c.h.b16 %v202
    %v1121 = vunpack.c.l.b16 %v203
    %v1122 = vunpack.c.h.b16 %v203
    %v1123 = vunpack.c.l.b16 %v204
    %v1124 = vunpack.c.h.b16 %v204
    %v1125 = vunpack.c.l.b16 %v205
    %v1126 = vunpack.c.h.b16 %v205
    %v1127 = vunpack.c.l.b16 %v206
    %v1128 = vunpack.c.h.b16 %v206
    %v1129 = vunpack.c.l.b16 %v207
    %v1130 = vunpack.c.h.b16 %v207
    %v1131 = vunpack.c.l.b16 %v208
    %v1132 = vunpack.c.h.b16 %v208
    %v1133 = vunpack.c.l.b16 %v209
    %v1134 = vunpack.c.h.b16 %v209
    %v1135 = vunpack.c.l.b16 %v210
    %v1136 = vunpack.c.h.b16 %v210
    %v1137 = vunpack.c.l.b16 %v211
    %v1138 = vunpack.c.h.b16 %v211
    %v1139 = vunpack.c.l.b16 %v212
    %v1140 = vunpack.c.h.b16 %v212
    %v1141 = vunpack.c.l.b16 %v213
    %v1142 = vunpack.c.h.b16 %v213
    %v1143 = vunpack.c.l.b16 %v214
    %v1144 = vunpack.c.h.b16 %v214
    %v1145 = vunpack.c.l.b16 %v215
    %v1146 = vunpack.c.h.b16 %v215
    %v1147 = vunpack.c.l.b16 %v216
    %v1148 = vunpack.c.h.b16 %v216
    %v1149 = vunpack.c.l.b16 %v217
    %v1150 = vunpack.c.h.b16 %v217
    %v1151 = vunpack.c.l.b16 %v218
    %v1152 = vunpack.c.h.b16 %v218
    %v1153 = vunpack.c.l.b16 %v219
    %v1154 = vunpack.c.h.b16 %v219
    %v1155 = vunpack.c.l.b16 %v220
    %v1156 = vunpack.c.h.b16 %v220
    %v1157 = vunpack.c.l.b16 %v221
    %v1158 = vunpack.c.h.b16 %v221
    %v1159 = vunpack.c.l.b16 %v222
    %v1160 = vunpack.c.h.b16 %v222
    %v1161 = vunpack.c.l.b16 %v223
    %v1162 = vunpack.c.h.b16 %v223
    %v1163 = vunpack.c.l.b16 %v224
    %v1164 = vunpack.c.h.b16 %v224
    %v1165 = vunpack.c.l.b16 %v225
    %v1166 = vunpack.c.h.b16 %v225
    %v1167 = vunpack.c.l.b16 %v226
    %v1168 = vunpack.c.h.b16 %v226
    %v1169 = vunpack.c.l.b16 %v227
    %v1170 = vunpack.c.h.b16 %v227
    %v1171 = vunpack.c.l.b16 %v228
    %v1172 = vunpack.c.h.b16 %v228
    %v1173 = vunpack.c.l.b16 %v229
    %v1174 = vunpack.c.h.b16 %v229
    %v1175 = vunpack.c.l.b16 %v230
    %v1176 = vunpack.c.h.b16 %v230
    %v1177 = vunpack.c.l.b16 %v231
    %v1178 = vunpack.c.h.b16 %v231
    %v1179 = vunpack.c.l.b16 %v232
    %v1180 = vunpack.c.h.b16 %v232
    %v1181 = vunpack.c.l.b16 %v233
    %v1182 = vunpack.c.h.b16 %v233
    %v1183 = vunpack.c.l.b16 %v234
    %v1184 = vunpack.c.h.b16 %v234
    %v1185 = vunpack.c.l.b16 %v235
    %v1186 = vunpack.c.h.b16 %v235
    %v1187 = vunpack.c.l.b16 %v236
    %v1188 = vunpack.c.h.b16 %v236
    %v1189 = vunpack.c.l.b16 %v237
    %v1190 = vunpack.c.h.b16 %v237
    %v1191 = vunpack.c.l.b16 %v238
    %v1192 = vunpack.c.h.b16 %v238
    %v1193 = vunpack.c.l.b16 %v239
    %v1194 = vunpack.c.h.b16 %v239
    %v1195 = vunpack.c.l.b16 %v240
    %v1196 = vunpack.c.h.b16 %v240
    %v1197 = vunpack.c.l.b16 %v241
    %v1198 = vunpack.c.h.b16 %v241
    %v1199 = vunpack.c.l.b16 %v242
    %v1200 = vunpack.c.h.b16 %v242
    %v1201 = vunpack.c.l.b16 %v243
    %v1202 = vunpack.c.h.b16 %v243
    %v1203 = vunpack.c.l.b16 %v244
    %v1204 = vunpack.c.h.b16 %v244
    %v1205 = vunpack.c.l.b16 %v245
    %v1206 = vunpack.c.h.b16 %v245
    %v1207 = vunpack.c.l.b16 %v246
    %v1208 = vunpack.c.h.b16 %v246
    %v1209 = vunpack.c.l.b16 %v247
    %v1210 = vunpack.c.h.b16 %v247
    %v1211 = vunpack.c.l.b16 %v248
    %v1212 = vunpack.c.h.b16 %v248
    %v1213 = vunpack.c.l.b16 %v249
    %v1214 = vunpack.c.h.b16 %v249
    %v1215 = vunpack.c.l.b16 %v250
    %v1216 = vunpack.c.h.b16 %v250
    %v1217 = vunpack.c.l.b16 %v251
    %v1218 = vunpack.c.h.b16 %v251
    %v1219 = vunpack.c.l.b16 %v252
    %v1220 = vunpack.c.h.b16 %v252
    %v1221 = vunpack.c.l.b16 %v253
    %v1222 = vunpack.c.h.b16 %v253
    %v1223 = vunpack.c.l.b16 %v254
    %v1224 = vunpack.c.h.b16 %v254
    %v1225 = vunpack.c.l.b16 %v255
    %v1226 = vunpack.c.h.b16 %v255
    %v1227 = vunpack.c.l.b16 %v256
    %v1228 = vunpack.c.h.b16 %v256
    %v1229 = vunpack.c.l.b16 %v257
    %v1230 = vunpack.c.h.b16 %v257
    %v1231 = vunpack.c.l.b16 %v258
    %v1232 = vunpack.c.h.b16 %v258
    %v1233 = vunpack.c.l.b16 %v259
    %v1234 = vunpack.c.h.b16 %v259
    %v1235 = vunpack.c.l.b16 %v260
    %v1236 = vunpack.c.h.b16 %v260
    %v1237 = vunpack.c.l.b16 %v261
    %v1238 = vunpack.c.h.b16 %v261
    %v1239 = vunpack.c.l.b16 %v262
    %v1240 = vunpack.c.h.b16 %v262
    %v1241 = vunpack.c.l.b16 %v263
    %v1242 = vunpack.c.h.b16 %v263
    %v1243 = vunpack.c.l.b16 %v264
    %v1244 = vunpack.c.h.b16 %v264
    %v1245 = vunpack.c.l.b16 %v265
    %v1246 = vunpack.c.h.b16 %v265
    %v1247 = vunpack.c.l.b16 %v266
    %v1248 = vunpack.c.h.b16 %v266
    %v1249 = vunpack.c.l.b16 %v267
    %v1250 = vunpack.c.h.b16 %v267
    %v1251 = vunpack.c.l.b16 %v268
    %v1252 = vunpack.c.h.b16 %v268
    %v1253 = vunpack.c.l.b16 %v269
    %v1254 = vunpack.c.h.b16 %v269
    %v1255 = vunpack.c.l.b16 %v270
    %v1256 = vunpack.c.h.b16 %v270
    %v1257 = vunpack.c.l.b16 %v271
    %v1258 = vunpack.c.h.b16 %v271
    %v1259 = vunpack.c.l.b16 %v272
    %v1260 = vunpack.c.h.b16 %v272
    %v1261 = vunpack.c.l.b16 %v273
    %v1262 = vunpack.c.h.b16 %v273
    %v1263 = vunpack.c.l.b16 %v274
    %v1264 = vunpack.c.h.b16 %v274
    %v1265 = vunpack.c.l.b16 %v275
    %v1266 = vunpack.c.h.b16 %v275
    %v1267 = vunpack.c.l.b16 %v276
    %v1268 = vunpack.c.h.b16 %v276
    %v1269 = vunpack.c.l.b16 %v277
    %v1270 = vunpack.c.h.b16 %v277
    %v1271 = vunpack.c.l.b16 %v278
    %v1272 = vunpack.c.h.b16 %v278
    %v1273 = vunpack.c.l.b16 %v279
    %v1274 = vunpack.c.h.b16 %v279
    %v1275 = vunpack.c.l.b16 %v280
    %v1276 = vunpack.c.h.b16 %v280
    %v1277 = vunpack.c.l.b16 %v281
    %v1278 = vunpack.c.h.b16 %v281
    %v1279 = vunpack.c.l.b16 %v282
    %v1280 = vunpack.c.h.b16 %v282
    %v1281 = vunpack.c.l.b16 %v283
    %v1282 = vunpack.c.h.b16 %v283
    %v1283 = vunpack.c.l.b16 %v284
    %v1284 = vunpack.c.h.b16 %v284
    %v1285 = vunpack.c.l.b16 %v285
    %v1286 = vunpack.c.h.b16 %v285
    %v1287 = vunpack.c.l.b16 %v286
    %v1288 = vunpack.c.h.b16 %v286
    %v1289 = vunpack.c.l.b16 %v287
    %v1290 = vunpack.c.h.b16 %v287
    %v1291 = vunpack.c.l.b16 %v288
    %v1292 = vunpack.c.h.b16 %v288
    %v1293 = vunpack.c.l.b16 %v289
    %v1294 = vunpack.c.h.b16 %v289
    %v1295 = vunpack.c.l.b16 %v290
    %v1296 = vunpack.c.h.b16 %v290
    %v1297 = vunpack.c.l.b16 %v291
    %v1298 = vunpack.c.h.b16 %v291
    %v1299 = vunpack.c.l.b16 %v292
    %v1300 = vunpack.c.h.b16 %v292
    %v1301 = vunpack.c.l.b16 %v293
    %v1302 = vunpack.c.h.b16 %v293
    %v1303 = vunpack.c.l.b16 %v294
    %v1304 = vunpack.c.h.b16 %v294
    %v1305 = vunpack.c.l.b16 %v295
    %v1306 = vunpack.c.h.b16 %v295
    %v1307 = vunpack.c.l.b16 %v296
    %v1308 = vunpack.c.h.b16 %v296
    %v1309 = vunpack.c.l.b16 %v297
    %v1310 = vunpack.c.h.b16 %v297
    %v1311 = vunpack.c.l.b16 %v298
    %v1312 = vunpack.c.h.b16 %v298
    %v1313 = vunpack.c.l.b16 %v299
    %v1314 = vunpack.c.h.b16 %v299
    %v1315 = vunpack.c.l.b16 %v300
    %v1316 = vunpack.c.h.b16 %v300
    %v1317 = vunpack.c.l.b16 %v301
    %v1318 = vunpack.c.h.b16 %v301
    %v1319 = vunpack.c.l.b16 %v302
    %v1320 = vunpack.c.h.b16 %v302
    %v1321 = vunpack.c.l.b16 %v303
    %v1322 = vunpack.c.h.b16 %v303
    %v1323 = vunpack.c.l.b16 %v304
    %v1324 = vunpack.c.h.b16 %v304
    %v1325 = vunpack.c.l.b16 %v305
    %v1326 = vunpack.c.h.b16 %v305
    %v1327 = vunpack.c.l.b16 %v306
    %v1328 = vunpack.c.h.b16 %v306
    %v1329 = vunpack.c.l.b16 %v307
    %v1330 = vunpack.c.h.b16 %v307
    %v1331 = vunpack.c.l.b16 %v308
    %v1332 = vunpack.c.h.b16 %v308
    %v1333 = vunpack.c.l.b16 %v309
    %v1334 = vunpack.c.h.b16 %v309
    %v1335 = vunpack.c.l.b16 %v310
    %v1336 = vunpack.c.h.b16 %v310
    %v1337 = vunpack.c.l.b16 %v311
    %v1338 = vunpack.c.h.b16 %v311
    %v1339 = vunpack.c.l.b16 %v312
    %v1340 = vunpack.c.h.b16 %v312
    %v1341 = vunpack.c.l.b16 %v313
    %v1342 = vunpack.c.h.b16 %v313
    %v1343 = vunpack.c.l.b16 %v314
    %v1344 = vunpack.c.h.b16 %v314
    %v1345 = vunpack.c.l.b16 %v315
    %v1346 = vunpack.c.h.b16 %v315
    %v1347 = vunpack.c.l.b16 %v316
    %v1348 = vunpack.c.h.b16 %v316
    %v1349 = vunpack.c.l.b16 %v317
    %v1350 = vunpack.c.h.b16 %v317
    %v1351 = vunpack.c.l.b16 %v318
    %v1352 = vunpack.c.h.b16 %v318
    %v1353 = vunpack.c.l.b16 %v319
    %v1354 = vunpack.c.h.b16 %v319
    %v1355 = vunpack.c.l.b16 %v320
    %v1356 = vunpack.c.h.b16 %v320
    %v1357 = vunpack.c.l.b16 %v321
    %v1358 = vunpack.c.h.b16 %v321
    %v1359 = vunpack.c.l.b16 %v322
    %v1360 = vunpack.c.h.b16 %v322
    %v1361 = vunpack.c.l.b16 %v323
    %v1362 = vunpack.c.h.b16 %v323
    %v1363 = vunpack.c.l.b16 %v324
    %v1364 = vunpack.c.h.b16 %v324
    %v1365 = vunpack.c.l.b16 %v325
    %v1366 = vunpack.c.h.b16 %v325
    %v1367 = vunpack.c.l.b16 %v326
    %v1368 = vunpack.c.h.b16 %v326
    %v1369 = vunpack.c.l.b16 %v327
    %v1370 = vunpack.c.h.b16 %v327
    %v1371 = vunpack.c.l.b16 %v328
    %v1372 = vunpack.c.h.b16 %v328
    %v1373 = vunpack.c.l.b16 %v329
    %v1374 = vunpack.c.h.b16 %v329
    %v1375 = vunpack.c.l.b16 %v330
    %v1376 = vunpack.c.h.b16 %v330
    %v1377 = vunpack.c.l.b16 %v331
    %v1378 = vunpack.c.h.b16 %v331
    %v1379 = vunpack.c.l.b16 %v332
    %v1380 = vunpack.c.h.b16 %v332
    %v1381 = vunpack.c.l.b16 %v333
    %v1382 = vunpack.c.h.b16 %v333
    %v1383 = vunpack.c.l.b16 %v334
    %v1384 = vunpack.c.h.b16 %v334
    %v1385 = vunpack.c.l.b16 %v335
    %v1386 = vunpack.c.h.b16 %v335
    %v1387 = vunpack.c.l.b16 %v336
    %v1388 = vunpack.c.h.b16 %v336
    %v1389 = vunpack.c.l.b16 %v337
    %v1390 = vunpack.c.h.b16 %v337
    %v1391 = vunpack.c.l.b16 %v338
    %v1392 = vunpack.c.h.b16 %v338
    %v1393 = vunpack.c.l.b16 %v339
    %v1394 = vunpack.c.h.b16 %v339
    %v1395 = vunpack.c.l.b16 %v340
    %v1396 = vunpack.c.h.b16 %v340
    %v1397 = vunpack.c.l.b16 %v341
    %v1398 = vunpack.c.h.b16 %v341
    %v1399 = vunpack.c.l.b16 %v342
    %v1400 = vunpack.c.h.b16 %v342
    %v1401 = vunpack.c.l.b16 %v343
    %v1402 = vunpack.c.h.b16 %v343
    %v1403 = vunpack.c.l.b16 %v344
    %v1404 = vunpack.c.h.b16 %v344
    %v1405 = vunpack.c.l.b16 %v345
    %v1406 = vunpack.c.h.b16 %v345
    %v1407 = vunpack.c.l.b16 %v346
    %v1408 = vunpack.c.h.b16 %v346
    %v1409 = vunpack.c.l.b16 %v347
    %v1410 = vunpack.c.h.b16 %v347
    %v1411 = vunpack.c.l.b16 %v348
    %v1412 = vunpack.c.h.b16 %v348
    %v1413 = vunpack.c.l.b16 %v349
    %v1414 = vunpack.c.h.b16 %v349
    %v1415 = vunpack.c.l.b16 %v350
    %v1416 = vunpack.c.h.b16 %v350
    %v1417 = vunpack.c.l.b16 %v351
    %v1418 = vunpack.c.h.b16 %v351
    %v1419 = vunpack.c.l.b16 %v352
    %v1420 = vunpack.c.h.b16 %v352
    %v1421 = vunpack.c.l.b16 %v353
    %v1422 = vunpack.c.h.b16 %v353
    %v1423 = vunpack.c.l.b16 %v354
    %v1424 = vunpack.c.h.b16 %v354
    %v1425 = vunpack.c.l.b16 %v355
    %v1426 = vunpack.c.h.b16 %v355
    %v1427 = vunpack.c.l.b16 %v356
    %v1428 = vunpack.c.h.b16 %v356
    %v1429 = vunpack.c.l.b16 %v357
    %v1430 = vunpack.c.h.b16 %v357
    %v1431 = vunpack.c.l.b16 %v358
    %v1432 = vunpack.c.h.b16 %v358
    %v1433 = vunpack.c.l.b16 %v359
    %v1434 = vunpack.c.h.b16 %v359
    %v1435 = vunpack.c.l.b16 %v360
    %v1436 = vunpack.c.h.b16 %v360
    %v1437 = vunpack.c.l.b16 %v361
    %v1438 = vunpack.c.h.b16 %v361
    %v1439 = vunpack.c.l.b16 %v362
    %v1440 = vunpack.c.h.b16 %v362
    %v1441 = vunpack.c.l.b16 %v363
    %v1442 = vunpack.c.h.b16 %v363
    %v1443 = vunpack.c.l.b16 %v364
    %v1444 = vunpack.c.h.b16 %v364
    %v1445 = vunpack.c.l.b16 %v365
    %v1446 = vunpack.c.h.b16 %v365
    %v1447 = vunpack.c.l.b16 %v366
    %v1448 = vunpack.c.h.b16 %v366
    %v1449 = vunpack.c.l.b16 %v367
    %v1450 = vunpack.c.h.b16 %v367
    %v1451 = vunpack.c.l.b16 %v368
    %v1452 = vunpack.c.h.b16 %v368
    %v1453 = vunpack.c.l.b16 %v369
    %v1454 = vunpack.c.h.b16 %v369
    %v1455 = vunpack.c.l.b16 %v370
    %v1456 = vunpack.c.h.b16 %v370
    %v1457 = vunpack.c.l.b16 %v371
    %v1458 = vunpack.c.h.b16 %v371
    %v1459 = vunpack.c.l.b16 %v372
    %v1460 = vunpack.c.h.b16 %v372
    %v1461 = vunpack.c.l.b16 %v373
    %v1462 = vunpack.c.h.b16 %v373
    %v1463 = vunpack.c.l.b16 %v374
    %v1464 = vunpack.c.h.b16 %v374
    %v1465 = vunpack.c.l.b16 %v375
    %v1466 = vunpack.c.h.b16 %v375
    %v1467 = vunpack.c.l.b16 %v376
    %v1468 = vunpack.c.h.b16 %v376
    %v1469 = vunpack.c.l.b16 %v377
    %v1470 = vunpack.c.h.b16 %v377
    %v1471 = vunpack.c.l.b16 %v378
    %v1472 = vunpack.c.h.b16 %v378
    %v1473 = vunpack.c.l.b16 %v379
    %v1474 = vunpack.c.h.b16 %v379
    %v1475 = vunpack.c.l.b16 %v380
    %v1476 = vunpack.c.h.b16 %v380
    %v1477 = vunpack.c.l.b16 %v381
    %v1478 = vunpack.c.h.b16 %v381
    %v1479 = vunpack.c.l.b16 %v382
    %v1480 = vunpack.c.h.b16 %v382
    %v1481 = vunpack.c.l.b16 %v383
    %v1482 = vunpack.c.h.b16 %v383
    %v1483 = vunpack.c.l.b16 %v384
    %v1484 = vunpack.c.h.b16 %v384
    %v1485 = vunpack.c.l.b16 %v385
    %v1486 = vunpack.c.h.b16 %v385
    %v1487 = vunpack.c.l.b16 %v386
    %v1488 = vunpack.c.h.b16 %v386
    %v1489 = vunpack.c.l.b16 %v387
    %v1490 = vunpack.c.h.b16 %v387
    %v1491 = vunpack.c.l.b16 %v388
    %v1492 = vunpack.c.h.b16 %v388
    %v1493 = vunpack.c.l.b16 %v389
    %v1494 = vunpack.c.h.b16 %v389
    %v1495 = vunpack.c.l.b16 %v390
    %v1496 = vunpack.c.h.b16 %v390
    %v1497 = vunpack.c.l.b16 %v391
    %v1498 = vunpack.c.h.b16 %v391
    %v1499 = vunpack.c.l.b16 %v392
    %v1500 = vunpack.c.h.b16 %v392
    %v1501 = vunpack.c.l.b16 %v393
    %v1502 = vunpack.c.h.b16 %v393
    %v1503 = vunpack.c.l.b16 %v394
    %v1504 = vunpack.c.h.b16 %v394
    %v1505 = vunpack.c.l.b16 %v395
    %v1506 = vunpack.c.h.b16 %v395
    %v1507 = vunpack.c.l.b16 %v396
    %v1508 = vunpack.c.h.b16 %v396
    %v1509 = vunpack.c.l.b16 %v397
    %v1510 = vunpack.c.h.b16 %v397
    %v1511 = vunpack.c.l.b16 %v398
    %v1512 = vunpack.c.h.b16 %v398
    %v1513 = vunpack.c.l.b16 %v399
    %v1514 = vunpack.c.h.b16 %v399
    %v1515 = vunpack.c.l.b16 %v400
    %v1516 = vunpack.c.h.b16 %v400
    %v1517 = vunpack.c.l.b16 %v401
    %v1518 = vunpack.c.h.b16 %v401
    %v1519 = vunpack.c.l.b16 %v402
    %v1520 = vunpack.c.h.b16 %v402
    %v1521 = vunpack.c.l.b16 %v403
    %v1522 = vunpack.c.h.b16 %v403
    %v1523 = vunpack.c.l.b16 %v404
    %v1524 = vunpack.c.h.b16 %v404
    %v1525 = vunpack.c.l.b16 %v405
    %v1526 = vunpack.c.h.b16 %v405
    %v1527 = vunpack.c.l.b16 %v406
    %v1528 = vunpack.c.h.b16 %v406
    %v1529 = vunpack.c.l.b16 %v407
    %v1530 = vunpack.c.h.b16 %v407
    %v1531 = vunpack.c.l.b16 %v408
    %v1532 = vunpack.c.h.b16 %v408
    %v1533 = vunpack.c.l.b16 %v409
    %v1534 = vunpack.c.h.b16 %v409
    %v1535 = vunpack.c.l.b16 %v410
    %v1536 = vunpack.c.h.b16 %v410
    %v1537 = vunpack.c.l.b16 %v411
    %v1538 = vunpack.c.h.b16 %v411
    %v1539 = vunpack.c.l.b16 %v412
    %v1540 = vunpack.c.h.b16 %v412
    %v1541 = vunpack.c.l.b16 %v413
    %v1542 = vunpack.c.h.b16 %v413
    %v1543 = vunpack.c.l.b16 %v414
    %v1544 = vunpack.c.h.b16 %v414
    %v1545 = vunpack.c.l.b16 %v415
    %v1546 = vunpack.c.h.b16 %v415
    %v1547 = vunpack.c.l.b16 %v416
    %v1548 = vunpack.c.h.b16 %v416
    %v1549 = vunpack.c.l.b16 %v417
    %v1550 = vunpack.c.h.b16 %v417
    %v1551 = vunpack.c.l.b16 %v418
    %v1552 = vunpack.c.h.b16 %v418
    %v1553 = vunpack.c.l.b16 %v419
    %v1554 = vunpack.c.h.b16 %v419
    %v1555 = vunpack.c.l.b16 %v420
    %v1556 = vunpack.c.h.b16 %v420
    %v1557 = vunpack.c.l.b16 %v421
    %v1558 = vunpack.c.h.b16 %v421
    %v1559 = vunpack.c.l.b16 %v422
    %v1560 = vunpack.c.h.b16 %v422
    %v1561 = vunpack.c.l.b16 %v423
    %v1562 = vunpack.c.h.b16 %v423
    %v1563 = vunpack.c.l.b16 %v424
    %v1564 = vunpack.c.h.b16 %v424
    %v1565 = vunpack.c.l.b16 %v425
    %v1566 = vunpack.c.h.b16 %v425
    %v1567 = vunpack.c.l.b16 %v426
    %v1568 = vunpack.c.h.b16 %v426
    %v1569 = vunpack.c.l.b16 %v427
    %v1570 = vunpack.c.h.b16 %v427
    %v1571 = vunpack.c.l.b16 %v428
    %v1572 = vunpack.c.h.b16 %v428
    %v1573 = vunpack.c.l.b16 %v429
    %v1574 = vunpack.c.h.b16 %v429
    %v1575 = vunpack.c.l.b16 %v430
    %v1576 = vunpack.c.h.b16 %v430
    %v1577 = vunpack.c.l.b16 %v431
    %v1578 = vunpack.c.h.b16 %v431
    %v1579 = vunpack.c.l.b16 %v432
    %v1580 = vunpack.c.h.b16 %v432
    %v1581 = vunpack.c.l.b16 %v433
    %v1582 = vunpack.c.h.b16 %v433
    %v1583 = vunpack.c.l.b16 %v434
    %v1584 = vunpack.c.h.b16 %v434
    %v1585 = vunpack.c.l.b16 %v435
    %v1586 = vunpack.c.h.b16 %v435
    %v1587 = vunpack.c.l.b16 %v436
    %v1588 = vunpack.c.h.b16 %v436
    %v1589 = vunpack.c.l.b16 %v437
    %v1590 = vunpack.c.h.b16 %v437
    %v1591 = vunpack.c.l.b16 %v438
    %v1592 = vunpack.c.h.b16 %v438
    %v1593 = vunpack.c.l.b16 %v439
    %v1594 = vunpack.c.h.b16 %v439
    %v1595 = vunpack.c.l.b16 %v440
    %v1596 = vunpack.c.h.b16 %v440
    %v1597 = vunpack.c.l.b16 %v441
    %v1598 = vunpack.c.h.b16 %v441
    %v1599 = vunpack.c.l.b16 %v442
    %v1600 = vunpack.c.h.b16 %v442
    %v1601 = vunpack.c.l.b16 %v443
    %v1602 = vunpack.c.h.b16 %v443
    %v1603 = vunpack.c.l.b16 %v444
    %v1604 = vunpack.c.h.b16 %v444
    %v1605 = vunpack.c.l.b16 %v445
    %v1606 = vunpack.c.h.b16 %v445
    %v1607 = vunpack.c.l.b16 %v446
    %v1608 = vunpack.c.h.b16 %v446
    %v1609 = vunpack.c.l.b16 %v447
    %v1610 = vunpack.c.h.b16 %v447
    %v1611 = vunpack.c.l.b16 %v448
    %v1612 = vunpack.c.h.b16 %v448
    %v1613 = vunpack.c.l.b16 %v449
    %v1614 = vunpack.c.h.b16 %v449
    %v1615 = vunpack.c.l.b16 %v450
    %v1616 = vunpack.c.h.b16 %v450
    %v1617 = vunpack.c.l.b16 %v451
    %v1618 = vunpack.c.h.b16 %v451
    %v1619 = vunpack.c.l.b16 %v452
    %v1620 = vunpack.c.h.b16 %v452
    %v1621 = vunpack.c.l.b16 %v453
    %v1622 = vunpack.c.h.b16 %v453
    %v1623 = vunpack.c.l.b16 %v454
    %v1624 = vunpack.c.h.b16 %v454
    %v1625 = vunpack.c.l.b16 %v455
    %v1626 = vunpack.c.h.b16 %v455
    %v1627 = vunpack.c.l.b16 %v456
    %v1628 = vunpack.c.h.b16 %v456
    %v1629 = vunpack.c.l.b16 %v457
    %v1630 = vunpack.c.h.b16 %v457
    %v1631 = vunpack.c.l.b16 %v458
    %v1632 = vunpack.c.h.b16 %v458
    %v1633 = vunpack.c.l.b16 %v459
    %v1634 = vunpack.c.h.b16 %v459
    %v1635 = vunpack.c.l.b16 %v460
    %v1636 = vunpack.c.h.b16 %v460
    %v1637 = vunpack.c.l.b16 %v461
    %v1638 = vunpack.c.h.b16 %v461
    %v1639 = vunpack.c.l.b16 %v462
    %v1640 = vunpack.c.h.b16 %v462
    %v1641 = vunpack.c.l.b16 %v463
    %v1642 = vunpack.c.h.b16 %v463
    %v1643 = vunpack.c.l.b16 %v464
    %v1644 = vunpack.c.h.b16 %v464
    %v1645 = vunpack.c.l.b16 %v465
    %v1646 = vunpack.c.h.b16 %v465
    %v1647 = vunpack.c.l.b16 %v466
    %v1648 = vunpack.c.h.b16 %v466
    %v1649 = vunpack.c.l.b16 %v467
    %v1650 = vunpack.c.h.b16 %v467
    %v1651 = vunpack.c.l.b16 %v468
    %v1652 = vunpack.c.h.b16 %v468
    %v1653 = vunpack.c.l.b16 %v469
    %v1654 = vunpack.c.h.b16 %v469
    %v1655 = vunpack.c.l.b16 %v470
    %v1656 = vunpack.c.h.b16 %v470
    %v1657 = vunpack.c.l.b16 %v471
    %v1658 = vunpack.c.h.b16 %v471
    %v1659 = vunpack.c.l.b16 %v472
    %v1660 = vunpack.c.h.b16 %v472
    %v1661 = vunpack.c.l.b16 %v473
    %v1662 = vunpack.c.h.b16 %v473
    %v1663 = vunpack.c.l.b16 %v474
    %v1664 = vunpack.c.h.b16 %v474
    %v1665 = vunpack.c.l.b16 %v475
    %v1666 = vunpack.c.h.b16 %v475
    %v1667 = vunpack.c.l.b16 %v476
    %v1668 = vunpack.c.h.b16 %v476
    %v1669 = vunpack.c.l.b16 %v477
    %v1670 = vunpack.c.h.b16 %v477
    %v1671 = vunpack.c.l.b16 %v478
    %v1672 = vunpack.c.h.b16 %v478
    %v1673 = vpack.c.b16 %v897, %v889
    %v1674 = vpack.c.b16 %v898, %v890
    %v1675 = vpack.c.b16 %v899, %v891
    %v1676 = vpack.c.b16 %v900, %v892
    %v1677 = vpack.c.b16 %v901, %v893
    %v1678 = vpack.c.b16 %v902, %v894
    %v1679 = vpack.c.b16 %v903, %v895
    %v1680 = vpack.c.b16 %v904, %v896
    %v1681 = vpack.c.b16 %v913, %v905
    %v1682 = vpack.c.b16 %v914, %v906
    %v1683 = vpack.c.b16 %v915, %v907
    %v1684 = vpack.c.b16 %v916, %v908
    %v1685 = vpack.c.b16 %v917, %v909
    %v1686 = vpack.c.b16 %v918, %v910
    %v1687 = vpack.c.b16 %v919, %v911
    %v1688 = vpack.c.b16 %v920, %v912
    %v1689 = vpack.c.b16 %v929, %v921
    %v1690 = vpack.c.b16 %v930, %v922
    %v1691 = vpack.c.b16 %v931, %v923
    %v1692 = vpack.c.b16 %v932, %v924
    %v1693 = vpack.c.b16 %v933, %v925
    %v1694 = vpack.c.b16 %v934, %v926
    %v1695 = vpack.c.b16 %v935, %v927
    %v1696 = vpack.c.b16 %v936, %v928
    %v1697 = vpack.c.b16 %v945, %v937
    %v1698 = vpack.c.b16 %v946, %v938
    %v1699 = vpack.c.b16 %v947, %v939
    %v1700 = vpack.c.b16 %v948, %v940
    %v1701 = vpack.c.b16 %v949, %v941
    %v1702 = vpack.c.b16 %v950, %v942
    %v1703 = vpack.c.b16 %v951, %v943
    %v1704 = vpack.c.b16 %v952, %v944
    %v1705 = vpack.c.b16 %v961, %v953
    %v1706 = vpack.c.b16 %v962, %v954
    %v1707 = vpack.c.b16 %v963, %v955
    %v1708 = vpack.c.b16 %v964, %v956
    %v1709 = vpack.c.b16 %v965, %v957
    %v1710 = vpack.c.b16 %v966, %v958
    %v1711 = vpack.c.b16 %v967, %v959
    %v1712 = vpack.c.b16 %v968, %v960
    %v1713 = vpack.c.b16 %v977, %v969
    %v1714 = vpack.c.b16 %v978, %v970
    %v1715 = vpack.c.b16 %v979, %v971
    %v1716 = vpack.c.b16 %v980, %v972
    %v1717 = vpack.c.b16 %v981, %v973
    %v1718 = vpack.c.b16 %v982, %v974
    %v1719 = vpack.c.b16 %v983, %v975
    %v1720 = vpack.c.b16 %v984, %v976
    %v1721 = vpack.c.b16 %v993, %v985
    %v1722 = vpack.c.b16 %v994, %v986
    %v1723 = vpack.c.b16 %v995, %v987
    %v1724 = vpack.c.b16 %v996, %v988
    %v1725 = vpack.c.b16 %v997, %v989
    %v1726 = vpack.c.b16 %v998, %v990
    %v1727 = vpack.c.b16 %v999, %v991
    %v1728 = vpack.c.b16 %v1000, %v992
    %v1729 = vpack.c.b16 %v1009, %v1001
    %v1730 = vpack.c.b16 %v1010, %v1002
    %v1731 = vpack.c.b16 %v1011, %v1003
    %v1732 = vpack.c.b16 %v1012, %v1004
    %v1733 = vpack.c.b16 %v1013, %v1005
    %v1734 = vpack.c.b16 %v1014, %v1006
    %v1735 = vpack.c.b16 %v1015, %v1007
    %v1736 = vpack.c.b16 %v1016, %v1008
    %v1737 = vpack.c.b16 %v1025, %v1017
    %v1738 = vpack.c.b16 %v1026, %v1018
    %v1739 = vpack.c.b16 %v1027, %v1019
    %v1740 = vpack.c.b16 %v1028, %v1020
    %v1741 = vpack.c.b16 %v1029, %v1021
    %v1742 = vpack.c.b16 %v1030, %v1022
    %v1743 = vpack.c.b16 %v1031, %v1023
    %v1744 = vpack.c.b16 %v1032, %v1024
    %v1745 = vpack.c.b16 %v1041, %v1033
    %v1746 = vpack.c.b16 %v1042, %v1034
    %v1747 = vpack.c.b16 %v1043, %v1035
    %v1748 = vpack.c.b16 %v1044, %v1036
    %v1749 = vpack.c.b16 %v1045, %v1037
    %v1750 = vpack.c.b16 %v1046, %v1038
    %v1751 = vpack.c.b16 %v1047, %v1039
    %v1752 = vpack.c.b16 %v1048, %v1040
    %v1753 = vpack.c.b16 %v1057, %v1049
    %v1754 = vpack.c.b16 %v1058, %v1050
    %v1755 = vpack.c.b16 %v1059, %v1051
    %v1756 = vpack.c.b16 %v1060, %v1052
    %v1757 = vpack.c.b16 %v1061, %v1053
    %v1758 = vpack.c.b16 %v1062, %v1054
    %v1759 = vpack.c.b16 %v1063, %v1055
    %v1760 = vpack.c.b16 %v1064, %v1056
    %v1761 = vpack.c.b16 %v1073, %v1065
    %v1762 = vpack.c.b16 %v1074, %v1066
    %v1763 = vpack.c.b16 %v1075, %v1067
    %v1764 = vpack.c.b16 %v1076, %v1068
    %v1765 = vpack.c.b16 %v1077, %v1069
    %v1766 = vpack.c.b16 %v1078, %v1070
    %v1767 = vpack.c.b16 %v1079, %v1071
    %v1768 = vpack.c.b16 %v1080, %v1072
    %v1769 = vpack.c.b16 %v1089, %v1081
    %v1770 = vpack.c.b16 %v1090, %v1082
    %v1771 = vpack.c.b16 %v1091, %v1083
    %v1772 = vpack.c.b16 %v1092, %v1084
    %v1773 = vpack.c.b16 %v1093, %v1085
    %v1774 = vpack.c.b16 %v1094, %v1086
    %v1775 = vpack.c.b16 %v1095, %v1087
    %v1776 = vpack.c.b16 %v1096, %v1088
    %v1777 = vpack.c.b16 %v1105, %v1097
    %v1778 = vpack.c.b16 %v1106, %v1098
    %v1779 = vpack.c.b16 %v1107, %v1099
    %v1780 = vpack.c.b16 %v1108, %v1100
    %v1781 = vpack.c.b16 %v1109, %v1101
    %v1782 = vpack.c.b16 %v1110, %v1102
    %v1783 = vpack.c.b16 %v1111, %v1103
    %v1784 = vpack.c.b16 %v1112, %v1104
    %v1785 = vpack.c.b16 %v1121, %v1113
    %v1786 = vpack.c.b16 %v1122, %v1114
    %v1787 = vpack.c.b16 %v1123, %v1115
    %v1788 = vpack.c.b16 %v1124, %v1116
    %v1789 = vpack.c.b16 %v1125, %v1117
    %v1790 = vpack.c.b16 %v1126, %v1118
    %v1791 = vpack.c.b16 %v1127, %v1119
    %v1792 = vpack.c.b16 %v1128, %v1120
    %v1793 = vpack.c.b16 %v1137, %v1129
    %v1794 = vpack.c.b16 %v1138, %v1130
    %v1795 = vpack.c.b16 %v1139, %v1131
    %v1796 = vpack.c.b16 %v1140, %v1132
    %v1797 = vpack.c.b16 %v1141, %v1133
    %v1798 = vpack.c.b16 %v1142, %v1134
    %v1799 = vpack.c.b16 %v1143, %v1135
    %v1800 = vpack.c.b16 %v1144, %v1136
    %v1801 = vpack.c.b16 %v1153, %v1145
    %v1802 = vpack.c.b16 %v1154, %v1146
    %v1803 = vpack.c.b16 %v1155, %v1147
    %v1804 = vpack.c.b16 %v1156, %v1148
    %v1805 = vpack.c.b16 %v1157, %v1149
    %v1806 = vpack.c.b16 %v1158, %v1150
    %v1807 = vpack.c.b16 %v1159, %v1151
    %v1808 = vpack.c.b16 %v1160, %v1152
    %v1809 = vpack.c.b16 %v1169, %v1161
    %v1810 = vpack.c.b16 %v1170, %v1162
    %v1811 = vpack.c.b16 %v1171, %v1163
    %v1812 = vpack.c.b16 %v1172, %v1164
    %v1813 = vpack.c.b16 %v1173, %v1165
    %v1814 = vpack.c.b16 %v1174, %v1166
    %v1815 = vpack.c.b16 %v1175, %v1167
    %v1816 = vpack.c.b16 %v1176, %v1168
    %v1817 = vpack.c.b16 %v1185, %v1177
    %v1818 = vpack.c.b16 %v1186, %v1178
    %v1819 = vpack.c.b16 %v1187, %v1179
    %v1820 = vpack.c.b16 %v1188, %v1180
    %v1821 = vpack.c.b16 %v1189, %v1181
    %v1822 = vpack.c.b16 %v1190, %v1182
    %v1823 = vpack.c.b16 %v1191, %v1183
    %v1824 = vpack.c.b16 %v1192, %v1184
    %v1825 = vpack.c.b16 %v1201, %v1193
    %v1826 = vpack.c.b16 %v1202, %v1194
    %v1827 = vpack.c.b16 %v1203, %v1195
    %v1828 = vpack.c.b16 %v1204, %v1196
    %v1829 = vpack.c.b16 %v1205, %v1197
    %v1830 = vpack.c.b16 %v1206, %v1198
    %v1831 = vpack.c.b16 %v1207, %v1199
    %v1832 = vpack.c.b16 %v1208, %v1200
    %v1833 = vpack.c.b16 %v1217, %v1209
    %v1834 = vpack.c.b16 %v1218, %v1210
    %v1835 = vpack.c.b16 %v1219, %v1211
    %v1836 = vpack.c.b16 %v1220, %v1212
    %v1837 = vpack.c.b16 %v1221, %v1213
    %v1838 = vpack.c.b16 %v1222, %v1214
    %v1839 = vpack.c.b16 %v1223, %v1215
    %v1840 = vpack.c.b16 %v1224, %v1216
    %v1841 = vpack.c.b16 %v1233, %v1225
    %v1842 = vpack.c.b16 %v1234, %v1226
    %v1843 = vpack.c.b16 %v1235, %v1227
    %v1844 = vpack.c.b16 %v1236, %v1228
    %v1845 = vpack.c.b16 %v1237, %v1229
    %v1846 = vpack.c.b16 %v1238, %v1230
    %v1847 = vpack.c.b16 %v1239, %v1231
    %v1848 = vpack.c.b16 %v1240, %v1232
    %v1849 = vpack.c.b16 %v1249, %v1241
    %v1850 = vpack.c.b16 %v1250, %v1242
    %v1851 = vpack.c.b16 %v1251, %v1243
    %v1852 = vpack.c.b16 %v1252, %v1244
    %v1853 = vpack.c.b16 %v1253, %v1245
    %v1854 = vpack.c.b16 %v1254, %v1246
    %v1855 = vpack.c.b16 %v1255, %v1247
    %v1856 = vpack.c.b16 %v1256, %v1248
    %v1857 = vpack.c.b16 %v1265, %v1257
    %v1858 = vpack.c.b16 %v1266, %v1258
    %v1859 = vpack.c.b16 %v1267, %v1259
    %v1860 = vpack.c.b16 %v1268, %v1260
    %v1861 = vpack.c.b16 %v1269, %v1261
    %v1862 = vpack.c.b16 %v1270, %v1262
    %v1863 = vpack.c.b16 %v1271, %v1263
    %v1864 = vpack.c.b16 %v1272, %v1264
    %v1865 = vpack.c.b16 %v1281, %v1273
    %v1866 = vpack.c.b16 %v1282, %v1274
    %v1867 = vpack.c.b16 %v1283, %v1275
    %v1868 = vpack.c.b16 %v1284, %v1276
    %v1869 = vpack.c.b16 %v1285, %v1277
    %v1870 = vpack.c.b16 %v1286, %v1278
    %v1871 = vpack.c.b16 %v1287, %v1279
    %v1872 = vpack.c.b16 %v1288, %v1280
    %v1873 = vpack.c.b16 %v1297, %v1289
    %v1874 = vpack.c.b16 %v1298, %v1290
    %v1875 = vpack.c.b16 %v1299, %v1291
    %v1876 = vpack.c.b16 %v1300, %v1292
    %v1877 = vpack.c.b16 %v1301, %v1293
    %v1878 = vpack.c.b16 %v1302, %v1294
    %v1879 = vpack.c.b16 %v1303, %v1295
    %v1880 = vpack.c.b16 %v1304, %v1296
    %v1881 = vpack.c.b16 %v1313, %v1305
    %v1882 = vpack.c.b16 %v1314, %v1306
    %v1883 = vpack.c.b16 %v1315, %v1307
    %v1884 = vpack.c.b16 %v1316, %v1308
    %v1885 = vpack.c.b16 %v1317, %v1309
    %v1886 = vpack.c.b16 %v1318, %v1310
    %v1887 = vpack.c.b16 %v1319, %v1311
    %v1888 = vpack.c.b16 %v1320, %v1312
    %v1889 = vpack.c.b16 %v1329, %v1321
    %v1890 = vpack.c.b16 %v1330, %v1322
    %v1891 = vpack.c.b16 %v1331, %v1323
    %v1892 = vpack.c.b16 %v1332, %v1324
    %v1893 = vpack.c.b16 %v1333, %v1325
    %v1894 = vpack.c.b16 %v1334, %v1326
    %v1895 = vpack.c.b16 %v1335, %v1327
    %v1896 = vpack.c.b16 %v1336, %v1328
    %v1897 = vpack.c.b16 %v1345, %v1337
    %v1898 = vpack.c.b16 %v1346, %v1338
    %v1899 = vpack.c.b16 %v1347, %v1339
    %v1900 = vpack.c.b16 %v1348, %v1340
    %v1901 = vpack.c.b16 %v1349, %v1341
    %v1902 = vpack.c.b16 %v1350, %v1342
    %v1903 = vpack.c.b16 %v1351, %v1343
    %v1904 = vpack.c.b16 %v1352, %v1344
    %v1905 = vpack.c.b16 %v1361, %v1353
    %v1906 = vpack.c.b16 %v1362, %v1354
    %v1907 = vpack.c.b16 %v1363, %v1355
    %v1908 = vpack.c.b16 %v1364, %v1356
    %v1909 = vpack.c.b16 %v1365, %v1357
    %v1910 = vpack.c.b16 %v1366, %v1358
    %v1911 = vpack.c.b16 %v1367, %v1359
    %v1912 = vpack.c.b16 %v1368, %v1360
    %v1913 = vpack.c.b16 %v1377, %v1369
    %v1914 = vpack.c.b16 %v1378, %v1370
    %v1915 = vpack.c.b16 %v1379, %v1371
    %v1916 = vpack.c.b16 %v1380, %v1372
    %v1917 = vpack.c.b16 %v1381, %v1373
    %v1918 = vpack.c.b16 %v1382, %v1374
    %v1919 = vpack.c.b16 %v1383, %v1375
    %v1920 = vpack.c.b16 %v1384, %v1376
    %v1921 = vpack.c.b16 %v1393, %v1385
    %v1922 = vpack.c.b16 %v1394, %v1386
    %v1923 = vpack.c.b16 %v1395, %v1387
    %v1924 = vpack.c.b16 %v1396, %v1388
    %v1925 = vpack.c.b16 %v1397, %v1389
    %v1926 = vpack.c.b16 %v1398, %v1390
    %v1927 = vpack.c.b16 %v1399, %v1391
    %v1928 = vpack.c.b16 %v1400, %v1392
    %v1929 = vpack.c.b16 %v1409, %v1401
    %v1930 = vpack.c.b16 %v1410, %v1402
    %v1931 = vpack.c.b16 %v1411, %v1403
    %v1932 = vpack.c.b16 %v1412, %v1404
    %v1933 = vpack.c.b16 %v1413, %v1405
    %v1934 = vpack.c.b16 %v1414, %v1406
    %v1935 = vpack.c.b16 %v1415, %v1407
    %v1936 = vpack.c.b16 %v1416, %v1408
    %v1937 = vpack.c.b16 %v1425, %v1417
    %v1938 = vpack.c.b16 %v1426, %v1418
    %v1939 = vpack.c.b16 %v1427, %v1419
    %v1940 = vpack.c.b16 %v1428, %v1420
    %v1941 = vpack.c.b16 %v1429, %v1421
    %v1942 = vpack.c.b16 %v1430, %v1422
    %v1943 = vpack.c.b16 %v1431, %v1423
    %v1944 = vpack.c.b16 %v1432, %v1424
    %v1945 = vpack.c.b16 %v1441, %v1433
    %v1946 = vpack.c.b16 %v1442, %v1434
    %v1947 = vpack.c.b16 %v1443, %v1435
    %v1948 = vpack.c.b16 %v1444, %v1436
    %v1949 = vpack.c.b16 %v1445, %v1437
    %v1950 = vpack.c.b16 %v1446, %v1438
    %v1951 = vpack.c.b16 %v1447, %v1439
    %v1952 = vpack.c.b16 %v1448, %v1440
    %v1953 = vpack.c.b16 %v1457, %v1449
    %v1954 = vpack.c.b16 %v1458, %v1450
    %v1955 = vpack.c.b16 %v1459, %v1451
    %v1956 = vpack.c.b16 %v1460, %v1452
    %v1957 = vpack.c.b16 %v1461, %v1453
    %v1958 = vpack.c.b16 %v1462, %v1454
    %v1959 = vpack.c.b16 %v1463, %v1455
    %v1960 = vpack.c.b16 %v1464, %v1456
    %v1961 = vpack.c.b16 %v1473, %v1465
    %v1962 = vpack.c.b16 %v1474, %v1466
    %v1963 = vpack.c.b16 %v1475, %v1467
    %v1964 = vpack.c.b16 %v1476, %v1468
    %v1965 = vpack.c.b16 %v1477, %v1469
    %v1966 = vpack.c.b16 %v1478, %v1470
    %v1967 = vpack.c.b16 %v1479, %v1471
    %v1968 = vpack.c.b16 %v1480, %v1472
    %v1969 = vpack.c.b16 %v1489, %v1481
    %v1970 = vpack.c.b16 %v1490, %v1482
    %v1971 = vpack.c.b16 %v1491, %v1483
    %v1972 = vpack.c.b16 %v1492, %v1484
    %v1973 = vpack.c.b16 %v1493, %v1485
    %v1974 = vpack.c.b16 %v1494, %v1486
    %v1975 = vpack.c.b16 %v1495, %v1487
    %v1976 = vpack.c.b16 %v1496, %v1488
    %v1977 = vpack.c.b16 %v1505, %v1497
    %v1978 = vpack.c.b16 %v1506, %v1498
    %v1979 = vpack.c.b16 %v1507, %v1499
    %v1980 = vpack.c.b16 %v1508, %v1500
    %v1981 = vpack.c.b16 %v1509, %v1501
    %v1982 = vpack.c.b16 %v1510, %v1502
    %v1983 = vpack.c.b16 %v1511, %v1503
    %v1984 = vpack.c.b16 %v1512, %v1504
    %v1985 = vpack.c.b16 %v1521, %v1513
    %v1986 = vpack.c.b16 %v1522, %v1514
    %v1987 = vpack.c.b16 %v1523, %v1515
    %v1988 = vpack.c.b16 %v1524, %v1516
    %v1989 = vpack.c.b16 %v1525, %v1517
    %v1990 = vpack.c.b16 %v1526, %v1518
    %v1991 = vpack.c.b16 %v1527, %v1519
    %v1992 = vpack.c.b16 %v1528, %v1520
    %v1993 = vpack.c.b16 %v1537, %v1529
    %v1994 = vpack.c.b16 %v1538, %v1530
    %v1995 = vpack.c.b16 %v1539, %v1531
    %v1996 = vpack.c.b16 %v1540, %v1532
    %v1997 = vpack.c.b16 %v1541, %v1533
    %v1998 = vpack.c.b16 %v1542, %v1534
    %v1999 = vpack.c.b16 %v1543, %v1535
    %v2000 = vpack.c.b16 %v1544, %v1536
    %v2001 = vpack.c.b16 %v1553, %v1545
    %v2002 = vpack.c.b16 %v1554, %v1546
    %v2003 = vpack.c.b16 %v1555, %v1547
    %v2004 = vpack.c.b16 %v1556, %v1548
    %v2005 = vpack.c.b16 %v1557, %v1549
    %v2006 = vpack.c.b16 %v1558, %v1550
    %v2007 = vpack.c.b16 %v1559, %v1551
    %v2008 = vpack.c.b16 %v1560, %v1552
    %v2009 = vpack.c.b16 %v1569, %v1561
    %v2010 = vpack.c.b16 %v1570, %v1562
    %v2011 = vpack.c.b16 %v1571, %v1563
    %v2012 = vpack.c.b16 %v1572, %v1564
    %v2013 = vpack.c.b16 %v1573, %v1565
    %v2014 = vpack.c.b16 %v1574, %v1566
    %v2015 = vpack.c.b16 %v1575, %v1567
    %v2016 = vpack.c.b16 %v1576, %v1568
    %v2017 = vpack.c.b16 %v1585, %v1577
    %v2018 = vpack.c.b16 %v1586, %v1578
    %v2019 = vpack.c.b16 %v1587, %v1579
    %v2020 = vpack.c.b16 %v1588, %v1580
    %v2021 = vpack.c.b16 %v1589, %v1581
    %v2022 = vpack.c.b16 %v1590, %v1582
    %v2023 = vpack.c.b16 %v1591, %v1583
    %v2024 = vpack.c.b16 %v1592, %v1584
    %v2025 = vpack.c.b16 %v1601, %v1593
    %v2026 = vpack.c.b16 %v1602, %v1594
    %v2027 = vpack.c.b16 %v1603, %v1595
    %v2028 = vpack.c.b16 %v1604, %v1596
    %v2029 = vpack.c.b16 %v1605, %v1597
    %v2030 = vpack.c.b16 %v1606, %v1598
    %v2031 = vpack.c.b16 %v1607, %v1599
    %v2032 = vpack.c.b16 %v1608, %v1600
    %v2033 = vpack.c.b16 %v1617, %v1609
    %v2034 = vpack.c.b16 %v1618, %v1610
    %v2035 = vpack.c.b16 %v1619, %v1611
    %v2036 = vpack.c.b16 %v1620, %v1612
    %v2037 = vpack.c.b16 %v1621, %v1613
    %v2038 = vpack.c.b16 %v1622, %v1614
    %v2039 = vpack.c.b16 %v1623, %v1615
    %v2040 = vpack.c.b16 %v1624, %v1616
    %v2041 = vpack.c.b16 %v1633, %v1625
    %v2042 = vpack.c.b16 %v1634, %v1626
    %v2043 = vpack.c.b16 %v1635, %v1627
    %v2044 = vpack.c.b16 %v1636, %v1628
    %v2045 = vpack.c.b16 %v1637, %v1629
    %v2046 = vpack.c.b16 %v1638, %v1630
    %v2047 = vpack.c.b16 %v1639, %v1631
    %v2048 = vpack.c.b16 %v1640, %v1632
    %v2049 = vpack.c.b16 %v1649, %v1641
    %v2050 = vpack.c.b16 %v1650, %v1642
    %v2051 = vpack.c.b16 %v1651, %v1643
    %v2052 = vpack.c.b16 %v1652, %v1644
    %v2053 = vpack.c.b16 %v1653, %v1645
    %v2054 = vpack.c.b16 %v1654, %v1646
    %v2055 = vpack.c.b16 %v1655, %v1647
    %v2056 = vpack.c.b16 %v1656, %v1648
    %v2057 = vpack.c.b16 %v1665, %v1657
    %v2058 = vpack.c.b16 %v1666, %v1658
    %v2059 = vpack.c.b16 %v1667, %v1659
    %v2060 = vpack.c.b16 %v1668, %v1660
    %v2061 = vpack.c.b16 %v1669, %v1661
    %v2062 = vpack.c.b16 %v1670, %v1662
    %v2063 = vpack.c.b16 %v1671, %v1663
    %v2064 = vpack.c.b16 %v1672, %v1664
    %vm2457 = vcmask 130048
    %v2459 = vsel %vm2457, %v86, 0
    %2461 = vmatpush.bf16.msra.mxu0 %v1729
    %2462 = vmatpush.bf16.msra.mxu0 %v1721
    %2463 = vmatpush.bf16.msra.mxu0 %v1713
    %2464 = vmatpush.bf16.msra.mxu0 %v1705
    %2465 = vmatpush.bf16.msra.mxu0 %v1697
    %2466 = vmatpush.bf16.msra.mxu0 %v1689
    %2467 = vmatpush.bf16.msra.mxu0 %v1681
    %2468 = vmatpush.bf16.msra.mxu0 %v1673
    %2469 = vmatmul.bf16.gmra.mxu0 %v80
    %v2470 = vpop.f32.mrf.mxu0
    %v2471 = vadd.f32 %v481, %v2470
    %v2472 = vpop.f32.mrf.mxu0
    %2473 = vdwg.mxu0
    %2474 = vmatpush.bf16.msra.mxu0 %v1793
    %2475 = vmatpush.bf16.msra.mxu0 %v1785
    %2476 = vmatpush.bf16.msra.mxu0 %v1777
    %2477 = vmatpush.bf16.msra.mxu0 %v1769
    %2478 = vmatpush.bf16.msra.mxu0 %v1761
    %2479 = vmatpush.bf16.msra.mxu0 %v1753
    %2480 = vmatpush.bf16.msra.mxu0 %v1745
    %2481 = vmatpush.bf16.msra.mxu0 %v1737
    %2482 = vmatmul.bf16.gmra.mxu0 %v81
    %v2483 = vpop.f32.mrf.mxu0
    %v2484 = vadd.f32 %v2471, %v2483
    %v2485 = vpop.f32.mrf.mxu0
    %2486 = vdwg.mxu0
    %2487 = vmatpush.bf16.msra.mxu0 %v1857
    %2488 = vmatpush.bf16.msra.mxu0 %v1849
    %2489 = vmatpush.bf16.msra.mxu0 %v1841
    %2490 = vmatpush.bf16.msra.mxu0 %v1833
    %2491 = vmatpush.bf16.msra.mxu0 %v1825
    %2492 = vmatpush.bf16.msra.mxu0 %v1817
    %2493 = vmatpush.bf16.msra.mxu0 %v1809
    %2494 = vmatpush.bf16.msra.mxu0 %v1801
    %2495 = vmatmul.bf16.gmra.mxu0 %v82
    %v2496 = vpop.f32.mrf.mxu0
    %v2497 = vadd.f32 %v2484, %v2496
    %v2498 = vpop.f32.mrf.mxu0
    %2499 = vdwg.mxu0
    %2500 = vmatpush.bf16.msra.mxu0 %v1921
    %2501 = vmatpush.bf16.msra.mxu0 %v1913
    %2502 = vmatpush.bf16.msra.mxu0 %v1905
    %2503 = vmatpush.bf16.msra.mxu0 %v1897
    %2504 = vmatpush.bf16.msra.mxu0 %v1889
    %2505 = vmatpush.bf16.msra.mxu0 %v1881
    %2506 = vmatpush.bf16.msra.mxu0 %v1873
    %2507 = vmatpush.bf16.msra.mxu0 %v1865
    %2508 = vmatmul.bf16.gmra.mxu0 %v83
    %v2509 = vpop.f32.mrf.mxu0
    %v2510 = vadd.f32 %v2497, %v2509
    %v2511 = vpop.f32.mrf.mxu0
    %2512 = vdwg.mxu0
    %2513 = vmatpush.bf16.msra.mxu0 %v1985
    %2514 = vmatpush.bf16.msra.mxu0 %v1977
    %2515 = vmatpush.bf16.msra.mxu0 %v1969
    %2516 = vmatpush.bf16.msra.mxu0 %v1961
    %2517 = vmatpush.bf16.msra.mxu0 %v1953
    %2518 = vmatpush.bf16.msra.mxu0 %v1945
    %2519 = vmatpush.bf16.msra.mxu0 %v1937
    %2520 = vmatpush.bf16.msra.mxu0 %v1929
    %2521 = vmatmul.bf16.gmra.mxu0 %v84
    %v2522 = vpop.f32.mrf.mxu0
    %v2523 = vadd.f32 %v2510, %v2522
    %v2524 = vpop.f32.mrf.mxu0
    %2525 = vdwg.mxu0
    %2526 = vmatpush.bf16.msra.mxu0 %v2049
    %2527 = vmatpush.bf16.msra.mxu0 %v2041
    %2528 = vmatpush.bf16.msra.mxu0 %v2033
    %2529 = vmatpush.bf16.msra.mxu0 %v2025
    %2530 = vmatpush.bf16.msra.mxu0 %v2017
    %2531 = vmatpush.bf16.msra.mxu0 %v2009
    %2532 = vmatpush.bf16.msra.mxu0 %v2001
    %2533 = vmatpush.bf16.msra.mxu0 %v1993
    %2534 = vmatmul.bf16.gmra.mxu0 %v85
    %v2535 = vpop.f32.mrf.mxu0
    %v2536 = vadd.f32 %v2523, %v2535
    %v2537 = vpop.f32.mrf.mxu0
    %2538 = vdwg.mxu0
    %2539 = vmatpush.bf16.msra.mxu0 0
    %2540 = vmatpush.bf16.msra.mxu0 0
    %2541 = vmatpush.bf16.msra.mxu0 0
    %2542 = vmatpush.bf16.msra.mxu0 0
    %2543 = vmatpush.bf16.msra.mxu0 0
    %2544 = vmatpush.bf16.msra.mxu0 0
    %2545 = vmatpush.bf16.msra.mxu0 0
    %2546 = vmatpush.bf16.msra.mxu0 %v2057
    %2547 = vmatmul.bf16.gmra.mxu0 %v2459
    %v2548 = vpop.f32.mrf.mxu0
    %v2549 = vadd.f32 %v2536, %v2548
    %v2550 = vpop.f32.mrf.mxu0
    %2551 = vdwg.mxu0
    %2552 = vmatpush.bf16.msra.mxu0 %v1730
    %2553 = vmatpush.bf16.msra.mxu0 %v1722
    %2554 = vmatpush.bf16.msra.mxu0 %v1714
    %2555 = vmatpush.bf16.msra.mxu0 %v1706
    %2556 = vmatpush.bf16.msra.mxu0 %v1698
    %2557 = vmatpush.bf16.msra.mxu0 %v1690
    %2558 = vmatpush.bf16.msra.mxu0 %v1682
    %2559 = vmatpush.bf16.msra.mxu0 %v1674
    %2560 = vmatmul.bf16.gmra.mxu0 %v80
    %v2561 = vpop.f32.mrf.mxu0
    %v2562 = vadd.f32 %v482, %v2561
    %v2563 = vpop.f32.mrf.mxu0
    %2564 = vdwg.mxu0
    %2565 = vmatpush.bf16.msra.mxu0 %v1794
    %2566 = vmatpush.bf16.msra.mxu0 %v1786
    %2567 = vmatpush.bf16.msra.mxu0 %v1778
    %2568 = vmatpush.bf16.msra.mxu0 %v1770
    %2569 = vmatpush.bf16.msra.mxu0 %v1762
    %2570 = vmatpush.bf16.msra.mxu0 %v1754
    %2571 = vmatpush.bf16.msra.mxu0 %v1746
    %2572 = vmatpush.bf16.msra.mxu0 %v1738
    %2573 = vmatmul.bf16.gmra.mxu0 %v81
    %v2574 = vpop.f32.mrf.mxu0
    %v2575 = vadd.f32 %v2562, %v2574
    %v2576 = vpop.f32.mrf.mxu0
    %2577 = vdwg.mxu0
    %2578 = vmatpush.bf16.msra.mxu0 %v1858
    %2579 = vmatpush.bf16.msra.mxu0 %v1850
    %2580 = vmatpush.bf16.msra.mxu0 %v1842
    %2581 = vmatpush.bf16.msra.mxu0 %v1834
    %2582 = vmatpush.bf16.msra.mxu0 %v1826
    %2583 = vmatpush.bf16.msra.mxu0 %v1818
    %2584 = vmatpush.bf16.msra.mxu0 %v1810
    %2585 = vmatpush.bf16.msra.mxu0 %v1802
    %2586 = vmatmul.bf16.gmra.mxu0 %v82
    %v2587 = vpop.f32.mrf.mxu0
    %v2588 = vadd.f32 %v2575, %v2587
    %v2589 = vpop.f32.mrf.mxu0
    %2590 = vdwg.mxu0
    %2591 = vmatpush.bf16.msra.mxu0 %v1922
    %2592 = vmatpush.bf16.msra.mxu0 %v1914
    %2593 = vmatpush.bf16.msra.mxu0 %v1906
    %2594 = vmatpush.bf16.msra.mxu0 %v1898
    %2595 = vmatpush.bf16.msra.mxu0 %v1890
    %2596 = vmatpush.bf16.msra.mxu0 %v1882
    %2597 = vmatpush.bf16.msra.mxu0 %v1874
    %2598 = vmatpush.bf16.msra.mxu0 %v1866
    %2599 = vmatmul.bf16.gmra.mxu0 %v83
    %v2600 = vpop.f32.mrf.mxu0
    %v2601 = vadd.f32 %v2588, %v2600
    %v2602 = vpop.f32.mrf.mxu0
    %2603 = vdwg.mxu0
    %2604 = vmatpush.bf16.msra.mxu0 %v1986
    %2605 = vmatpush.bf16.msra.mxu0 %v1978
    %2606 = vmatpush.bf16.msra.mxu0 %v1970
    %2607 = vmatpush.bf16.msra.mxu0 %v1962
    %2608 = vmatpush.bf16.msra.mxu0 %v1954
    %2609 = vmatpush.bf16.msra.mxu0 %v1946
    %2610 = vmatpush.bf16.msra.mxu0 %v1938
    %2611 = vmatpush.bf16.msra.mxu0 %v1930
    %2612 = vmatmul.bf16.gmra.mxu0 %v84
    %v2613 = vpop.f32.mrf.mxu0
    %v2614 = vadd.f32 %v2601, %v2613
    %v2615 = vpop.f32.mrf.mxu0
    %2616 = vdwg.mxu0
    %2617 = vmatpush.bf16.msra.mxu0 %v2050
    %2618 = vmatpush.bf16.msra.mxu0 %v2042
    %2619 = vmatpush.bf16.msra.mxu0 %v2034
    %2620 = vmatpush.bf16.msra.mxu0 %v2026
    %2621 = vmatpush.bf16.msra.mxu0 %v2018
    %2622 = vmatpush.bf16.msra.mxu0 %v2010
    %2623 = vmatpush.bf16.msra.mxu0 %v2002
    %2624 = vmatpush.bf16.msra.mxu0 %v1994
    %2625 = vmatmul.bf16.gmra.mxu0 %v85
    %v2626 = vpop.f32.mrf.mxu0
    %v2627 = vadd.f32 %v2614, %v2626
    %v2628 = vpop.f32.mrf.mxu0
    %2629 = vdwg.mxu0
    %2630 = vmatpush.bf16.msra.mxu0 0
    %2631 = vmatpush.bf16.msra.mxu0 0
    %2632 = vmatpush.bf16.msra.mxu0 0
    %2633 = vmatpush.bf16.msra.mxu0 0
    %2634 = vmatpush.bf16.msra.mxu0 0
    %2635 = vmatpush.bf16.msra.mxu0 0
    %2636 = vmatpush.bf16.msra.mxu0 0
    %2637 = vmatpush.bf16.msra.mxu0 %v2058
    %2638 = vmatmul.bf16.gmra.mxu0 %v2459
    %v2639 = vpop.f32.mrf.mxu0
    %v2640 = vadd.f32 %v2627, %v2639
    %v2641 = vpop.f32.mrf.mxu0
    %2642 = vdwg.mxu0
    %2643 = vmatpush.bf16.msra.mxu0 %v1731
    %2644 = vmatpush.bf16.msra.mxu0 %v1723
    %2645 = vmatpush.bf16.msra.mxu0 %v1715
    %2646 = vmatpush.bf16.msra.mxu0 %v1707
    %2647 = vmatpush.bf16.msra.mxu0 %v1699
    %2648 = vmatpush.bf16.msra.mxu0 %v1691
    %2649 = vmatpush.bf16.msra.mxu0 %v1683
    %2650 = vmatpush.bf16.msra.mxu0 %v1675
    %2651 = vmatmul.bf16.gmra.mxu0 %v80
    %v2652 = vpop.f32.mrf.mxu0
    %v2653 = vadd.f32 %v483, %v2652
    %v2654 = vpop.f32.mrf.mxu0
    %2655 = vdwg.mxu0
    %2656 = vmatpush.bf16.msra.mxu0 %v1795
    %2657 = vmatpush.bf16.msra.mxu0 %v1787
    %2658 = vmatpush.bf16.msra.mxu0 %v1779
    %2659 = vmatpush.bf16.msra.mxu0 %v1771
    %2660 = vmatpush.bf16.msra.mxu0 %v1763
    %2661 = vmatpush.bf16.msra.mxu0 %v1755
    %2662 = vmatpush.bf16.msra.mxu0 %v1747
    %2663 = vmatpush.bf16.msra.mxu0 %v1739
    %2664 = vmatmul.bf16.gmra.mxu0 %v81
    %v2665 = vpop.f32.mrf.mxu0
    %v2666 = vadd.f32 %v2653, %v2665
    %v2667 = vpop.f32.mrf.mxu0
    %2668 = vdwg.mxu0
    %2669 = vmatpush.bf16.msra.mxu0 %v1859
    %2670 = vmatpush.bf16.msra.mxu0 %v1851
    %2671 = vmatpush.bf16.msra.mxu0 %v1843
    %2672 = vmatpush.bf16.msra.mxu0 %v1835
    %2673 = vmatpush.bf16.msra.mxu0 %v1827
    %2674 = vmatpush.bf16.msra.mxu0 %v1819
    %2675 = vmatpush.bf16.msra.mxu0 %v1811
    %2676 = vmatpush.bf16.msra.mxu0 %v1803
    %2677 = vmatmul.bf16.gmra.mxu0 %v82
    %v2678 = vpop.f32.mrf.mxu0
    %v2679 = vadd.f32 %v2666, %v2678
    %v2680 = vpop.f32.mrf.mxu0
    %2681 = vdwg.mxu0
    %2682 = vmatpush.bf16.msra.mxu0 %v1923
    %2683 = vmatpush.bf16.msra.mxu0 %v1915
    %2684 = vmatpush.bf16.msra.mxu0 %v1907
    %2685 = vmatpush.bf16.msra.mxu0 %v1899
    %2686 = vmatpush.bf16.msra.mxu0 %v1891
    %2687 = vmatpush.bf16.msra.mxu0 %v1883
    %2688 = vmatpush.bf16.msra.mxu0 %v1875
    %2689 = vmatpush.bf16.msra.mxu0 %v1867
    %2690 = vmatmul.bf16.gmra.mxu0 %v83
    %v2691 = vpop.f32.mrf.mxu0
    %v2692 = vadd.f32 %v2679, %v2691
    %v2693 = vpop.f32.mrf.mxu0
    %2694 = vdwg.mxu0
    %2695 = vmatpush.bf16.msra.mxu0 %v1987
    %2696 = vmatpush.bf16.msra.mxu0 %v1979
    %2697 = vmatpush.bf16.msra.mxu0 %v1971
    %2698 = vmatpush.bf16.msra.mxu0 %v1963
    %2699 = vmatpush.bf16.msra.mxu0 %v1955
    %2700 = vmatpush.bf16.msra.mxu0 %v1947
    %2701 = vmatpush.bf16.msra.mxu0 %v1939
    %2702 = vmatpush.bf16.msra.mxu0 %v1931
    %2703 = vmatmul.bf16.gmra.mxu0 %v84
    %v2704 = vpop.f32.mrf.mxu0
    %v2705 = vadd.f32 %v2692, %v2704
    %v2706 = vpop.f32.mrf.mxu0
    %2707 = vdwg.mxu0
    %2708 = vmatpush.bf16.msra.mxu0 %v2051
    %2709 = vmatpush.bf16.msra.mxu0 %v2043
    %2710 = vmatpush.bf16.msra.mxu0 %v2035
    %2711 = vmatpush.bf16.msra.mxu0 %v2027
    %2712 = vmatpush.bf16.msra.mxu0 %v2019
    %2713 = vmatpush.bf16.msra.mxu0 %v2011
    %2714 = vmatpush.bf16.msra.mxu0 %v2003
    %2715 = vmatpush.bf16.msra.mxu0 %v1995
    %2716 = vmatmul.bf16.gmra.mxu0 %v85
    %v2717 = vpop.f32.mrf.mxu0
    %v2718 = vadd.f32 %v2705, %v2717
    %v2719 = vpop.f32.mrf.mxu0
    %2720 = vdwg.mxu0
    %2721 = vmatpush.bf16.msra.mxu0 0
    %2722 = vmatpush.bf16.msra.mxu0 0
    %2723 = vmatpush.bf16.msra.mxu0 0
    %2724 = vmatpush.bf16.msra.mxu0 0
    %2725 = vmatpush.bf16.msra.mxu0 0
    %2726 = vmatpush.bf16.msra.mxu0 0
    %2727 = vmatpush.bf16.msra.mxu0 0
    %2728 = vmatpush.bf16.msra.mxu0 %v2059
    %2729 = vmatmul.bf16.gmra.mxu0 %v2459
    %v2730 = vpop.f32.mrf.mxu0
    %v2731 = vadd.f32 %v2718, %v2730
    %v2732 = vpop.f32.mrf.mxu0
    %2733 = vdwg.mxu0
    %2734 = vmatpush.bf16.msra.mxu0 %v1732
    %2735 = vmatpush.bf16.msra.mxu0 %v1724
    %2736 = vmatpush.bf16.msra.mxu0 %v1716
    %2737 = vmatpush.bf16.msra.mxu0 %v1708
    %2738 = vmatpush.bf16.msra.mxu0 %v1700
    %2739 = vmatpush.bf16.msra.mxu0 %v1692
    %2740 = vmatpush.bf16.msra.mxu0 %v1684
    %2741 = vmatpush.bf16.msra.mxu0 %v1676
    %2742 = vmatmul.bf16.gmra.mxu0 %v80
    %v2743 = vpop.f32.mrf.mxu0
    %v2744 = vadd.f32 %v484, %v2743
    %v2745 = vpop.f32.mrf.mxu0
    %2746 = vdwg.mxu0
    %2747 = vmatpush.bf16.msra.mxu0 %v1796
    %2748 = vmatpush.bf16.msra.mxu0 %v1788
    %2749 = vmatpush.bf16.msra.mxu0 %v1780
    %2750 = vmatpush.bf16.msra.mxu0 %v1772
    %2751 = vmatpush.bf16.msra.mxu0 %v1764
    %2752 = vmatpush.bf16.msra.mxu0 %v1756
    %2753 = vmatpush.bf16.msra.mxu0 %v1748
    %2754 = vmatpush.bf16.msra.mxu0 %v1740
    %2755 = vmatmul.bf16.gmra.mxu0 %v81
    %v2756 = vpop.f32.mrf.mxu0
    %v2757 = vadd.f32 %v2744, %v2756
    %v2758 = vpop.f32.mrf.mxu0
    %2759 = vdwg.mxu0
    %2760 = vmatpush.bf16.msra.mxu0 %v1860
    %2761 = vmatpush.bf16.msra.mxu0 %v1852
    %2762 = vmatpush.bf16.msra.mxu0 %v1844
    %2763 = vmatpush.bf16.msra.mxu0 %v1836
    %2764 = vmatpush.bf16.msra.mxu0 %v1828
    %2765 = vmatpush.bf16.msra.mxu0 %v1820
    %2766 = vmatpush.bf16.msra.mxu0 %v1812
    %2767 = vmatpush.bf16.msra.mxu0 %v1804
    %2768 = vmatmul.bf16.gmra.mxu0 %v82
    %v2769 = vpop.f32.mrf.mxu0
    %v2770 = vadd.f32 %v2757, %v2769
    %v2771 = vpop.f32.mrf.mxu0
    %2772 = vdwg.mxu0
    %2773 = vmatpush.bf16.msra.mxu0 %v1924
    %2774 = vmatpush.bf16.msra.mxu0 %v1916
    %2775 = vmatpush.bf16.msra.mxu0 %v1908
    %2776 = vmatpush.bf16.msra.mxu0 %v1900
    %2777 = vmatpush.bf16.msra.mxu0 %v1892
    %2778 = vmatpush.bf16.msra.mxu0 %v1884
    %2779 = vmatpush.bf16.msra.mxu0 %v1876
    %2780 = vmatpush.bf16.msra.mxu0 %v1868
    %2781 = vmatmul.bf16.gmra.mxu0 %v83
    %v2782 = vpop.f32.mrf.mxu0
    %v2783 = vadd.f32 %v2770, %v2782
    %v2784 = vpop.f32.mrf.mxu0
    %2785 = vdwg.mxu0
    %2786 = vmatpush.bf16.msra.mxu0 %v1988
    %2787 = vmatpush.bf16.msra.mxu0 %v1980
    %2788 = vmatpush.bf16.msra.mxu0 %v1972
    %2789 = vmatpush.bf16.msra.mxu0 %v1964
    %2790 = vmatpush.bf16.msra.mxu0 %v1956
    %2791 = vmatpush.bf16.msra.mxu0 %v1948
    %2792 = vmatpush.bf16.msra.mxu0 %v1940
    %2793 = vmatpush.bf16.msra.mxu0 %v1932
    %2794 = vmatmul.bf16.gmra.mxu0 %v84
    %v2795 = vpop.f32.mrf.mxu0
    %v2796 = vadd.f32 %v2783, %v2795
    %v2797 = vpop.f32.mrf.mxu0
    %2798 = vdwg.mxu0
    %2799 = vmatpush.bf16.msra.mxu0 %v2052
    %2800 = vmatpush.bf16.msra.mxu0 %v2044
    %2801 = vmatpush.bf16.msra.mxu0 %v2036
    %2802 = vmatpush.bf16.msra.mxu0 %v2028
    %2803 = vmatpush.bf16.msra.mxu0 %v2020
    %2804 = vmatpush.bf16.msra.mxu0 %v2012
    %2805 = vmatpush.bf16.msra.mxu0 %v2004
    %2806 = vmatpush.bf16.msra.mxu0 %v1996
    %2807 = vmatmul.bf16.gmra.mxu0 %v85
    %v2808 = vpop.f32.mrf.mxu0
    %v2809 = vadd.f32 %v2796, %v2808
    %v2810 = vpop.f32.mrf.mxu0
    %2811 = vdwg.mxu0
    %2812 = vmatpush.bf16.msra.mxu0 0
    %2813 = vmatpush.bf16.msra.mxu0 0
    %2814 = vmatpush.bf16.msra.mxu0 0
    %2815 = vmatpush.bf16.msra.mxu0 0
    %2816 = vmatpush.bf16.msra.mxu0 0
    %2817 = vmatpush.bf16.msra.mxu0 0
    %2818 = vmatpush.bf16.msra.mxu0 0
    %2819 = vmatpush.bf16.msra.mxu0 %v2060
    %2820 = vmatmul.bf16.gmra.mxu0 %v2459
    %v2821 = vpop.f32.mrf.mxu0
    %v2822 = vadd.f32 %v2809, %v2821
    %v2823 = vpop.f32.mrf.mxu0
    %2824 = vdwg.mxu0
    %2825 = vmatpush.bf16.msra.mxu0 %v1733
    %2826 = vmatpush.bf16.msra.mxu0 %v1725
    %2827 = vmatpush.bf16.msra.mxu0 %v1717
    %2828 = vmatpush.bf16.msra.mxu0 %v1709
    %2829 = vmatpush.bf16.msra.mxu0 %v1701
    %2830 = vmatpush.bf16.msra.mxu0 %v1693
    %2831 = vmatpush.bf16.msra.mxu0 %v1685
    %2832 = vmatpush.bf16.msra.mxu0 %v1677
    %2833 = vmatmul.bf16.gmra.mxu0 %v80
    %v2834 = vpop.f32.mrf.mxu0
    %v2835 = vadd.f32 %v485, %v2834
    %v2836 = vpop.f32.mrf.mxu0
    %2837 = vdwg.mxu0
    %2838 = vmatpush.bf16.msra.mxu0 %v1797
    %2839 = vmatpush.bf16.msra.mxu0 %v1789
    %2840 = vmatpush.bf16.msra.mxu0 %v1781
    %2841 = vmatpush.bf16.msra.mxu0 %v1773
    %2842 = vmatpush.bf16.msra.mxu0 %v1765
    %2843 = vmatpush.bf16.msra.mxu0 %v1757
    %2844 = vmatpush.bf16.msra.mxu0 %v1749
    %2845 = vmatpush.bf16.msra.mxu0 %v1741
    %2846 = vmatmul.bf16.gmra.mxu0 %v81
    %v2847 = vpop.f32.mrf.mxu0
    %v2848 = vadd.f32 %v2835, %v2847
    %v2849 = vpop.f32.mrf.mxu0
    %2850 = vdwg.mxu0
    %2851 = vmatpush.bf16.msra.mxu0 %v1861
    %2852 = vmatpush.bf16.msra.mxu0 %v1853
    %2853 = vmatpush.bf16.msra.mxu0 %v1845
    %2854 = vmatpush.bf16.msra.mxu0 %v1837
    %2855 = vmatpush.bf16.msra.mxu0 %v1829
    %2856 = vmatpush.bf16.msra.mxu0 %v1821
    %2857 = vmatpush.bf16.msra.mxu0 %v1813
    %2858 = vmatpush.bf16.msra.mxu0 %v1805
    %2859 = vmatmul.bf16.gmra.mxu0 %v82
    %v2860 = vpop.f32.mrf.mxu0
    %v2861 = vadd.f32 %v2848, %v2860
    %v2862 = vpop.f32.mrf.mxu0
    %2863 = vdwg.mxu0
    %2864 = vmatpush.bf16.msra.mxu0 %v1925
    %2865 = vmatpush.bf16.msra.mxu0 %v1917
    %2866 = vmatpush.bf16.msra.mxu0 %v1909
    %2867 = vmatpush.bf16.msra.mxu0 %v1901
    %2868 = vmatpush.bf16.msra.mxu0 %v1893
    %2869 = vmatpush.bf16.msra.mxu0 %v1885
    %2870 = vmatpush.bf16.msra.mxu0 %v1877
    %2871 = vmatpush.bf16.msra.mxu0 %v1869
    %2872 = vmatmul.bf16.gmra.mxu0 %v83
    %v2873 = vpop.f32.mrf.mxu0
    %v2874 = vadd.f32 %v2861, %v2873
    %v2875 = vpop.f32.mrf.mxu0
    %2876 = vdwg.mxu0
    %2877 = vmatpush.bf16.msra.mxu0 %v1989
    %2878 = vmatpush.bf16.msra.mxu0 %v1981
    %2879 = vmatpush.bf16.msra.mxu0 %v1973
    %2880 = vmatpush.bf16.msra.mxu0 %v1965
    %2881 = vmatpush.bf16.msra.mxu0 %v1957
    %2882 = vmatpush.bf16.msra.mxu0 %v1949
    %2883 = vmatpush.bf16.msra.mxu0 %v1941
    %2884 = vmatpush.bf16.msra.mxu0 %v1933
    %2885 = vmatmul.bf16.gmra.mxu0 %v84
    %v2886 = vpop.f32.mrf.mxu0
    %v2887 = vadd.f32 %v2874, %v2886
    %v2888 = vpop.f32.mrf.mxu0
    %2889 = vdwg.mxu0
    %2890 = vmatpush.bf16.msra.mxu0 %v2053
    %2891 = vmatpush.bf16.msra.mxu0 %v2045
    %2892 = vmatpush.bf16.msra.mxu0 %v2037
    %2893 = vmatpush.bf16.msra.mxu0 %v2029
    %2894 = vmatpush.bf16.msra.mxu0 %v2021
    %2895 = vmatpush.bf16.msra.mxu0 %v2013
    %2896 = vmatpush.bf16.msra.mxu0 %v2005
    %2897 = vmatpush.bf16.msra.mxu0 %v1997
    %2898 = vmatmul.bf16.gmra.mxu0 %v85
    %v2899 = vpop.f32.mrf.mxu0
    %v2900 = vadd.f32 %v2887, %v2899
    %v2901 = vpop.f32.mrf.mxu0
    %2902 = vdwg.mxu0
    %2903 = vmatpush.bf16.msra.mxu0 0
    %2904 = vmatpush.bf16.msra.mxu0 0
    %2905 = vmatpush.bf16.msra.mxu0 0
    %2906 = vmatpush.bf16.msra.mxu0 0
    %2907 = vmatpush.bf16.msra.mxu0 0
    %2908 = vmatpush.bf16.msra.mxu0 0
    %2909 = vmatpush.bf16.msra.mxu0 0
    %2910 = vmatpush.bf16.msra.mxu0 %v2061
    %2911 = vmatmul.bf16.gmra.mxu0 %v2459
    %v2912 = vpop.f32.mrf.mxu0
    %v2913 = vadd.f32 %v2900, %v2912
    %v2914 = vpop.f32.mrf.mxu0
    %2915 = vdwg.mxu0
    %2916 = vmatpush.bf16.msra.mxu0 %v1734
    %2917 = vmatpush.bf16.msra.mxu0 %v1726
    %2918 = vmatpush.bf16.msra.mxu0 %v1718
    %2919 = vmatpush.bf16.msra.mxu0 %v1710
    %2920 = vmatpush.bf16.msra.mxu0 %v1702
    %2921 = vmatpush.bf16.msra.mxu0 %v1694
    %2922 = vmatpush.bf16.msra.mxu0 %v1686
    %2923 = vmatpush.bf16.msra.mxu0 %v1678
    %2924 = vmatmul.bf16.gmra.mxu0 %v80
    %v2925 = vpop.f32.mrf.mxu0
    %v2926 = vadd.f32 %v486, %v2925
    %v2927 = vpop.f32.mrf.mxu0
    %2928 = vdwg.mxu0
    %2929 = vmatpush.bf16.msra.mxu0 %v1798
    %2930 = vmatpush.bf16.msra.mxu0 %v1790
    %2931 = vmatpush.bf16.msra.mxu0 %v1782
    %2932 = vmatpush.bf16.msra.mxu0 %v1774
    %2933 = vmatpush.bf16.msra.mxu0 %v1766
    %2934 = vmatpush.bf16.msra.mxu0 %v1758
    %2935 = vmatpush.bf16.msra.mxu0 %v1750
    %2936 = vmatpush.bf16.msra.mxu0 %v1742
    %2937 = vmatmul.bf16.gmra.mxu0 %v81
    %v2938 = vpop.f32.mrf.mxu0
    %v2939 = vadd.f32 %v2926, %v2938
    %v2940 = vpop.f32.mrf.mxu0
    %2941 = vdwg.mxu0
    %2942 = vmatpush.bf16.msra.mxu0 %v1862
    %2943 = vmatpush.bf16.msra.mxu0 %v1854
    %2944 = vmatpush.bf16.msra.mxu0 %v1846
    %2945 = vmatpush.bf16.msra.mxu0 %v1838
    %2946 = vmatpush.bf16.msra.mxu0 %v1830
    %2947 = vmatpush.bf16.msra.mxu0 %v1822
    %2948 = vmatpush.bf16.msra.mxu0 %v1814
    %2949 = vmatpush.bf16.msra.mxu0 %v1806
    %2950 = vmatmul.bf16.gmra.mxu0 %v82
    %v2951 = vpop.f32.mrf.mxu0
    %v2952 = vadd.f32 %v2939, %v2951
    %v2953 = vpop.f32.mrf.mxu0
    %2954 = vdwg.mxu0
    %2955 = vmatpush.bf16.msra.mxu0 %v1926
    %2956 = vmatpush.bf16.msra.mxu0 %v1918
    %2957 = vmatpush.bf16.msra.mxu0 %v1910
    %2958 = vmatpush.bf16.msra.mxu0 %v1902
    %2959 = vmatpush.bf16.msra.mxu0 %v1894
    %2960 = vmatpush.bf16.msra.mxu0 %v1886
    %2961 = vmatpush.bf16.msra.mxu0 %v1878
    %2962 = vmatpush.bf16.msra.mxu0 %v1870
    %2963 = vmatmul.bf16.gmra.mxu0 %v83
    %v2964 = vpop.f32.mrf.mxu0
    %v2965 = vadd.f32 %v2952, %v2964
    %v2966 = vpop.f32.mrf.mxu0
    %2967 = vdwg.mxu0
    %2968 = vmatpush.bf16.msra.mxu0 %v1990
    %2969 = vmatpush.bf16.msra.mxu0 %v1982
    %2970 = vmatpush.bf16.msra.mxu0 %v1974
    %2971 = vmatpush.bf16.msra.mxu0 %v1966
    %2972 = vmatpush.bf16.msra.mxu0 %v1958
    %2973 = vmatpush.bf16.msra.mxu0 %v1950
    %2974 = vmatpush.bf16.msra.mxu0 %v1942
    %2975 = vmatpush.bf16.msra.mxu0 %v1934
    %2976 = vmatmul.bf16.gmra.mxu0 %v84
    %v2977 = vpop.f32.mrf.mxu0
    %v2978 = vadd.f32 %v2965, %v2977
    %v2979 = vpop.f32.mrf.mxu0
    %2980 = vdwg.mxu0
    %2981 = vmatpush.bf16.msra.mxu0 %v2054
    %2982 = vmatpush.bf16.msra.mxu0 %v2046
    %2983 = vmatpush.bf16.msra.mxu0 %v2038
    %2984 = vmatpush.bf16.msra.mxu0 %v2030
    %2985 = vmatpush.bf16.msra.mxu0 %v2022
    %2986 = vmatpush.bf16.msra.mxu0 %v2014
    %2987 = vmatpush.bf16.msra.mxu0 %v2006
    %2988 = vmatpush.bf16.msra.mxu0 %v1998
    %2989 = vmatmul.bf16.gmra.mxu0 %v85
    %v2990 = vpop.f32.mrf.mxu0
    %v2991 = vadd.f32 %v2978, %v2990
    %v2992 = vpop.f32.mrf.mxu0
    %2993 = vdwg.mxu0
    %2994 = vmatpush.bf16.msra.mxu0 0
    %2995 = vmatpush.bf16.msra.mxu0 0
    %2996 = vmatpush.bf16.msra.mxu0 0
    %2997 = vmatpush.bf16.msra.mxu0 0
    %2998 = vmatpush.bf16.msra.mxu0 0
    %2999 = vmatpush.bf16.msra.mxu0 0
    %3000 = vmatpush.bf16.msra.mxu0 0
    %3001 = vmatpush.bf16.msra.mxu0 %v2062
    %3002 = vmatmul.bf16.gmra.mxu0 %v2459
    %v3003 = vpop.f32.mrf.mxu0
    %v3004 = vadd.f32 %v2991, %v3003
    %v3005 = vpop.f32.mrf.mxu0
    %3006 = vdwg.mxu0
    %3007 = vmatpush.bf16.msra.mxu0 %v1735
    %3008 = vmatpush.bf16.msra.mxu0 %v1727
    %3009 = vmatpush.bf16.msra.mxu0 %v1719
    %3010 = vmatpush.bf16.msra.mxu0 %v1711
    %3011 = vmatpush.bf16.msra.mxu0 %v1703
    %3012 = vmatpush.bf16.msra.mxu0 %v1695
    %3013 = vmatpush.bf16.msra.mxu0 %v1687
    %3014 = vmatpush.bf16.msra.mxu0 %v1679
    %3015 = vmatmul.bf16.gmra.mxu0 %v80
    %v3016 = vpop.f32.mrf.mxu0
    %v3017 = vadd.f32 %v487, %v3016
    %v3018 = vpop.f32.mrf.mxu0
    %3019 = vdwg.mxu0
    %3020 = vmatpush.bf16.msra.mxu0 %v1799
    %3021 = vmatpush.bf16.msra.mxu0 %v1791
    %3022 = vmatpush.bf16.msra.mxu0 %v1783
    %3023 = vmatpush.bf16.msra.mxu0 %v1775
    %3024 = vmatpush.bf16.msra.mxu0 %v1767
    %3025 = vmatpush.bf16.msra.mxu0 %v1759
    %3026 = vmatpush.bf16.msra.mxu0 %v1751
    %3027 = vmatpush.bf16.msra.mxu0 %v1743
    %3028 = vmatmul.bf16.gmra.mxu0 %v81
    %v3029 = vpop.f32.mrf.mxu0
    %v3030 = vadd.f32 %v3017, %v3029
    %v3031 = vpop.f32.mrf.mxu0
    %3032 = vdwg.mxu0
    %3033 = vmatpush.bf16.msra.mxu0 %v1863
    %3034 = vmatpush.bf16.msra.mxu0 %v1855
    %3035 = vmatpush.bf16.msra.mxu0 %v1847
    %3036 = vmatpush.bf16.msra.mxu0 %v1839
    %3037 = vmatpush.bf16.msra.mxu0 %v1831
    %3038 = vmatpush.bf16.msra.mxu0 %v1823
    %3039 = vmatpush.bf16.msra.mxu0 %v1815
    %3040 = vmatpush.bf16.msra.mxu0 %v1807
    %3041 = vmatmul.bf16.gmra.mxu0 %v82
    %v3042 = vpop.f32.mrf.mxu0
    %v3043 = vadd.f32 %v3030, %v3042
    %v3044 = vpop.f32.mrf.mxu0
    %3045 = vdwg.mxu0
    %3046 = vmatpush.bf16.msra.mxu0 %v1927
    %3047 = vmatpush.bf16.msra.mxu0 %v1919
    %3048 = vmatpush.bf16.msra.mxu0 %v1911
    %3049 = vmatpush.bf16.msra.mxu0 %v1903
    %3050 = vmatpush.bf16.msra.mxu0 %v1895
    %3051 = vmatpush.bf16.msra.mxu0 %v1887
    %3052 = vmatpush.bf16.msra.mxu0 %v1879
    %3053 = vmatpush.bf16.msra.mxu0 %v1871
    %3054 = vmatmul.bf16.gmra.mxu0 %v83
    %v3055 = vpop.f32.mrf.mxu0
    %v3056 = vadd.f32 %v3043, %v3055
    %v3057 = vpop.f32.mrf.mxu0
    %3058 = vdwg.mxu0
    %3059 = vmatpush.bf16.msra.mxu0 %v1991
    %3060 = vmatpush.bf16.msra.mxu0 %v1983
    %3061 = vmatpush.bf16.msra.mxu0 %v1975
    %3062 = vmatpush.bf16.msra.mxu0 %v1967
    %3063 = vmatpush.bf16.msra.mxu0 %v1959
    %3064 = vmatpush.bf16.msra.mxu0 %v1951
    %3065 = vmatpush.bf16.msra.mxu0 %v1943
    %3066 = vmatpush.bf16.msra.mxu0 %v1935
    %3067 = vmatmul.bf16.gmra.mxu0 %v84
    %v3068 = vpop.f32.mrf.mxu0
    %v3069 = vadd.f32 %v3056, %v3068
    %v3070 = vpop.f32.mrf.mxu0
    %3071 = vdwg.mxu0
    %3072 = vmatpush.bf16.msra.mxu0 %v2055
    %3073 = vmatpush.bf16.msra.mxu0 %v2047
    %3074 = vmatpush.bf16.msra.mxu0 %v2039
    %3075 = vmatpush.bf16.msra.mxu0 %v2031
    %3076 = vmatpush.bf16.msra.mxu0 %v2023
    %3077 = vmatpush.bf16.msra.mxu0 %v2015
    %3078 = vmatpush.bf16.msra.mxu0 %v2007
    %3079 = vmatpush.bf16.msra.mxu0 %v1999
    %3080 = vmatmul.bf16.gmra.mxu0 %v85
    %v3081 = vpop.f32.mrf.mxu0
    %v3082 = vadd.f32 %v3069, %v3081
    %v3083 = vpop.f32.mrf.mxu0
    %3084 = vdwg.mxu0
    %3085 = vmatpush.bf16.msra.mxu0 0
    %3086 = vmatpush.bf16.msra.mxu0 0
    %3087 = vmatpush.bf16.msra.mxu0 0
    %3088 = vmatpush.bf16.msra.mxu0 0
    %3089 = vmatpush.bf16.msra.mxu0 0
    %3090 = vmatpush.bf16.msra.mxu0 0
    %3091 = vmatpush.bf16.msra.mxu0 0
    %3092 = vmatpush.bf16.msra.mxu0 %v2063
    %3093 = vmatmul.bf16.gmra.mxu0 %v2459
    %v3094 = vpop.f32.mrf.mxu0
    %v3095 = vadd.f32 %v3082, %v3094
    %v3096 = vpop.f32.mrf.mxu0
    %3097 = vdwg.mxu0
    %3098 = vmatpush.bf16.msra.mxu0 %v1736
    %3099 = vmatpush.bf16.msra.mxu0 %v1728
    %3100 = vmatpush.bf16.msra.mxu0 %v1720
    %3101 = vmatpush.bf16.msra.mxu0 %v1712
    %3102 = vmatpush.bf16.msra.mxu0 %v1704
    %3103 = vmatpush.bf16.msra.mxu0 %v1696
    %3104 = vmatpush.bf16.msra.mxu0 %v1688
    %3105 = vmatpush.bf16.msra.mxu0 %v1680
    %3106 = vmatmul.bf16.gmra.mxu0 %v80
    %v3107 = vpop.f32.mrf.mxu0
    %v3108 = vadd.f32 %v488, %v3107
    %v3109 = vpop.f32.mrf.mxu0
    %3110 = vdwg.mxu0
    %3111 = vmatpush.bf16.msra.mxu0 %v1800
    %3112 = vmatpush.bf16.msra.mxu0 %v1792
    %3113 = vmatpush.bf16.msra.mxu0 %v1784
    %3114 = vmatpush.bf16.msra.mxu0 %v1776
    %3115 = vmatpush.bf16.msra.mxu0 %v1768
    %3116 = vmatpush.bf16.msra.mxu0 %v1760
    %3117 = vmatpush.bf16.msra.mxu0 %v1752
    %3118 = vmatpush.bf16.msra.mxu0 %v1744
    %3119 = vmatmul.bf16.gmra.mxu0 %v81
    %v3120 = vpop.f32.mrf.mxu0
    %v3121 = vadd.f32 %v3108, %v3120
    %v3122 = vpop.f32.mrf.mxu0
    %3123 = vdwg.mxu0
    %3124 = vmatpush.bf16.msra.mxu0 %v1864
    %3125 = vmatpush.bf16.msra.mxu0 %v1856
    %3126 = vmatpush.bf16.msra.mxu0 %v1848
    %3127 = vmatpush.bf16.msra.mxu0 %v1840
    %3128 = vmatpush.bf16.msra.mxu0 %v1832
    %3129 = vmatpush.bf16.msra.mxu0 %v1824
    %3130 = vmatpush.bf16.msra.mxu0 %v1816
    %3131 = vmatpush.bf16.msra.mxu0 %v1808
    %3132 = vmatmul.bf16.gmra.mxu0 %v82
    %v3133 = vpop.f32.mrf.mxu0
    %v3134 = vadd.f32 %v3121, %v3133
    %v3135 = vpop.f32.mrf.mxu0
    %3136 = vdwg.mxu0
    %3137 = vmatpush.bf16.msra.mxu0 %v1928
    %3138 = vmatpush.bf16.msra.mxu0 %v1920
    %3139 = vmatpush.bf16.msra.mxu0 %v1912
    %3140 = vmatpush.bf16.msra.mxu0 %v1904
    %3141 = vmatpush.bf16.msra.mxu0 %v1896
    %3142 = vmatpush.bf16.msra.mxu0 %v1888
    %3143 = vmatpush.bf16.msra.mxu0 %v1880
    %3144 = vmatpush.bf16.msra.mxu0 %v1872
    %3145 = vmatmul.bf16.gmra.mxu0 %v83
    %v3146 = vpop.f32.mrf.mxu0
    %v3147 = vadd.f32 %v3134, %v3146
    %v3148 = vpop.f32.mrf.mxu0
    %3149 = vdwg.mxu0
    %3150 = vmatpush.bf16.msra.mxu0 %v1992
    %3151 = vmatpush.bf16.msra.mxu0 %v1984
    %3152 = vmatpush.bf16.msra.mxu0 %v1976
    %3153 = vmatpush.bf16.msra.mxu0 %v1968
    %3154 = vmatpush.bf16.msra.mxu0 %v1960
    %3155 = vmatpush.bf16.msra.mxu0 %v1952
    %3156 = vmatpush.bf16.msra.mxu0 %v1944
    %3157 = vmatpush.bf16.msra.mxu0 %v1936
    %3158 = vmatmul.bf16.gmra.mxu0 %v84
    %v3159 = vpop.f32.mrf.mxu0
    %v3160 = vadd.f32 %v3147, %v3159
    %v3161 = vpop.f32.mrf.mxu0
    %3162 = vdwg.mxu0
    %3163 = vmatpush.bf16.msra.mxu0 %v2056
    %3164 = vmatpush.bf16.msra.mxu0 %v2048
    %3165 = vmatpush.bf16.msra.mxu0 %v2040
    %3166 = vmatpush.bf16.msra.mxu0 %v2032
    %3167 = vmatpush.bf16.msra.mxu0 %v2024
    %3168 = vmatpush.bf16.msra.mxu0 %v2016
    %3169 = vmatpush.bf16.msra.mxu0 %v2008
    %3170 = vmatpush.bf16.msra.mxu0 %v2000
    %3171 = vmatmul.bf16.gmra.mxu0 %v85
    %v3172 = vpop.f32.mrf.mxu0
    %v3173 = vadd.f32 %v3160, %v3172
    %v3174 = vpop.f32.mrf.mxu0
    %3175 = vdwg.mxu0
    %3176 = vmatpush.bf16.msra.mxu0 0
    %3177 = vmatpush.bf16.msra.mxu0 0
    %3178 = vmatpush.bf16.msra.mxu0 0
    %3179 = vmatpush.bf16.msra.mxu0 0
    %3180 = vmatpush.bf16.msra.mxu0 0
    %3181 = vmatpush.bf16.msra.mxu0 0
    %3182 = vmatpush.bf16.msra.mxu0 0
    %3183 = vmatpush.bf16.msra.mxu0 %v2064
    %3184 = vmatmul.bf16.gmra.mxu0 %v2459
    %v3185 = vpop.f32.mrf.mxu0
    %v3186 = vadd.f32 %v3173, %v3185
    %v3187 = vpop.f32.mrf.mxu0
    %3188 = vdwg.mxu0
    %v3189 = vmax.f32 %v2549, 0.0
    %v3190 = vmax.f32 %v2640, 0.0
    %v3191 = vmax.f32 %v2731, 0.0
    %v3192 = vmax.f32 %v2822, 0.0
    %v3193 = vmax.f32 %v2913, 0.0
    %v3194 = vmax.f32 %v3004, 0.0
    %v3195 = vmax.f32 %v3095, 0.0
    %v3196 = vmax.f32 %v3186, 0.0
    %v3205 = vrot.slane %v3190, 6
    %v3206 = vrot.slane %v3191, 4
    %v3207 = vrot.slane %v3192, 2
    %v3208 = vrot.slane %v3194, 6
    %v3209 = vrot.slane %v3195, 4
    %v3210 = vrot.slane %v3196, 2
    %vm3211 = vcmask 1041408
    %v3212 = vsel %vm3211, %v3189, %v3205
    %vm3213 = vcmask 1045508
    %v3214 = vsel %vm3213, %v3206, %v3207
    %vm3215 = vcmask 1043456
    %v3216 = vsel %vm3215, %v3212, %v3214
    %v3217 = vsel %vm3211, %v3193, %v3208
    %v3218 = vsel %vm3213, %v3209, %v3210
    %v3219 = vsel %vm3215, %v3217, %v3218
    %3222 = vst [vmem:[#allocation8] sm:$0xff] %v3216
    %3223 = vst [vmem:[#allocation8 + $0x8] sm:$0xff] %v3219
    // Predicated region
    $region26: #{_forward_impl.1} parent=1 // pred_check
      _
    $region27: #{_forward_impl.1} parent=1 // pred_check_branch
      %3225 = sbr.rel (0) target = $region29
    $region28: #{_forward_impl.1} parent=1 // pred_region
      %3227 = vsyncadd [#allocation4], 0
      %s3229 = sshll.u32 [#allocation8], 4
      %s3230 = int_to_ptr.vmem [resolvable:$true] %s3229
      %s3231 = sshll.u32 %s3, 4
      %s3232 = int_to_ptr.hbm [resolvable:$true] %s3231
      %3234 = dma.vmem_to_hbm [thread:$0]  %s3230, 256, %s3232, [#allocation4]
    $region29: #{_forward_impl.1} parent=1 // pred_fallthru
      _
    // Predicated region
    $region30: #{_forward_impl.1} parent=1 // pred_check
      _
    $region31: #{_forward_impl.1} parent=1 // pred_check_branch
      %3236 = sbr.rel (0) target = $region33
    $region32: #{_forward_impl.1} parent=1 // pred_region
      %3238 = dma.done [#allocation4], 256
    $region33: #{_forward_impl.1} parent=1 // pred_fallthru
      _
    %3239 = vsyncpa [#allocation3], 1
    %3240 = vsyncpa [#allocation6], 1
    %3241 = vsyncpa [#allocation4], 1

</llo_original>
